<compile_context>
chip_gen: v5e
topology: v5e:2x2
jax: 0.10.0
libtpu: 0.0.40
codegen_flags: <defaults>
</compile_context>

<pallas_src>
import functools

import numpy as np
import jax
import jax.numpy as jnp
from jax import lax
from jax.experimental import pallas as pl
from jax.experimental.pallas import tpu as pltpu


# ----------------------------------------------------------------------------
# Small host-side helpers (trace-time only).
# ----------------------------------------------------------------------------
def _round_up(x, m):
    return ((x + m - 1) // m) * m


def _tpu_generation():
    """Best-effort TPU generation from device_kind (0 if unknown)."""
    try:
        kind = jax.devices()[0].device_kind.lower()
    except Exception:
        return 0
    for g in (7, 6, 5, 4):
        if f"v{g}" in kind or f"tpu{g}" in kind:
            return g
    return 0


def _vmem_capacity_bytes(gen):
    try:
        cap = int(pltpu.get_tpu_info().vmem_capacity_bytes)
        if cap > 0:
            return cap
    except Exception:
        pass
    # v4/v5e/v6e: 128 MiB per TensorCore; v7x: 64 MiB; unknown: be safe.
    return (128 << 20) if gen in (4, 5, 6) else (64 << 20)


def _pick_tiles(HW, C, plane_elt, mm_elt, plane_budget, vmem_usable):
    """Return (TQ, TK, k_tiled)."""
    hw_q = _round_up(HW, 128)
    io = 2 * (C + 8) * 1024 * 4  # generous per-tile flow/grid/out estimate
    src_resident = 2 * C * HW * mm_elt  # double-buffered resident source
    # Source-resident path: build planes are (HW, TQ).
    for tq in (1024, 512, 256, 128):
        if tq > hw_q:
            continue
        planes = 6 * HW * tq * plane_elt
        if planes <= plane_budget and src_resident + planes + io + (4 << 20) <= vmem_usable:
            return tq, HW, False
    # K-tiled path: build planes are (TK, TQ); accumulate over source chunks.
    tq = 256 if hw_q >= 256 else 128
    tk = 128
    while tk < 8192:
        nxt = tk * 2
        planes = 5 * nxt * tq * plane_elt
        src = 2 * C * nxt * mm_elt
        if planes > plane_budget or planes + src + io + (4 << 20) > vmem_usable:
            break
        tk = nxt
    return tq, tk, True


# ----------------------------------------------------------------------------
# Kernel-side math shared by both kernels.
# ----------------------------------------------------------------------------
def _bilinear_weights(flow, base, H, W):
    """flow, base: (2, TQ) f32 -> masked corner weights (f32) + (x0, y0) ints.

    Matches torch grid_sample(mode='bilinear', padding_mode='zeros',
    align_corners=False) with grid = base + flow/((size-1)/2).
    """
    fx = flow[0:1, :] / ((W - 1.0) / 2.0)
    fy = flow[1:2, :] / ((H - 1.0) / 2.0)
    ix = ((base[0:1, :] + fx + 1.0) * W - 1.0) * 0.5
    iy = ((base[1:2, :] + fy + 1.0) * H - 1.0) * 0.5
    x0f = jnp.floor(ix)
    y0f = jnp.floor(iy)
    wx1 = ix - x0f
    wx0 = 1.0 - wx1
    wy1 = iy - y0f
    wy0 = 1.0 - wy1
    x0 = x0f.astype(jnp.int32)
    y0 = y0f.astype(jnp.int32)
    x1 = x0 + 1
    y1 = y0 + 1
    vx0 = (x0 >= 0) & (x0 <= W - 1)
    vx1 = (x1 >= 0) & (x1 <= W - 1)
    vy0 = (y0 >= 0) & (y0 <= H - 1)
    vy1 = (y1 >= 0) & (y1 <= H - 1)
    # Zeros-padding: mask the weights BEFORE they touch any one-hot plane.
    w00 = jnp.where(vy0 & vx0, wy0 * wx0, 0.0)
    w01 = jnp.where(vy0 & vx1, wy0 * wx1, 0.0)
    w10 = jnp.where(vy1 & vx0, wy1 * wx0, 0.0)
    w11 = jnp.where(vy1 & vx1, wy1 * wx1, 0.0)
    return (w00, w01, w10, w11), (x0, y0)


# ----------------------------------------------------------------------------
# Kernel A: source fully resident in VMEM (grid = (B, NQ)).
# ----------------------------------------------------------------------------
def _warp_kernel_resident(inp_ref, flow_ref, grid_ref, out_ref, *, H, W,
                          mm_dtype, build_dtype, precision):
    HW = inp_ref.shape[-1]
    (w00, w01, w10, w11), (x0, y0) = _bilinear_weights(
        flow_ref[0], grid_ref[...], H, W)

    # Base-corner flat index, wrapped into [0, HW).  Any partially-valid 2x2
    # neighborhood satisfies q0 >= -(W+1) > -HW (requires H >= 2; H==1 / W==1
    # are degenerate in the original module too), so one conditional +HW is the
    # exact modulus; fully out-of-bounds queries have all-zero weights so a
    # wrong column is harmless.
    q0 = y0 * W + x0
    q0 = jnp.where(q0 < 0, q0 + HW, q0)                     # (1, TQ)

    # One one-hot build (column-iota broadcast compare) + 2 XLU rolls.
    p_col = lax.broadcasted_iota(jnp.int32, (HW, 1), 0)
    e00 = (p_col == q0).astype(build_dtype)                 # (HW, TQ)
    e01 = pltpu.roll(e00, 1, axis=0)                        # corner (y0, x0+1)
    row0 = e00 * w00.astype(build_dtype) + e01 * w01.astype(build_dtype)
    row1 = e00 * w10.astype(build_dtype) + e01 * w11.astype(build_dtype)
    sample_mat = row0 + pltpu.roll(row1, W, axis=0)         # rows y0+1

    warped = jnp.dot(inp_ref[0], sample_mat.astype(mm_dtype),
                     preferred_element_type=jnp.float32,
                     precision=precision)                   # (C, TQ) f32

    # "partial" ones channel == sum of valid corner weights, kept in f32.
    mask_raw = w00 + w01 + w10 + w11
    mask = jnp.where(mask_raw > 0.999, 1.0, 0.0)
    out_ref[0] = (warped * mask).astype(out_ref.dtype)


# ----------------------------------------------------------------------------
# Kernel B: source-axis (K) reduction (grid = (B, NQ, NK)), for large HW.
# ----------------------------------------------------------------------------
def _warp_kernel_ktiled(inp_ref, flow_ref, grid_ref, out_ref, *, H, W, TK,
                        mm_dtype, build_dtype, precision):
    k = pl.program_id(2)
    nk = pl.num_programs(2)
    (w00, w01, w10, w11), (x0, y0) = _bilinear_weights(
        flow_ref[0], grid_ref[...], H, W)
    x1 = x0 + 1
    y1 = y0 + 1
    # Per-corner flat indices; out-of-range values simply never match any row
    # of any source chunk and their weights are already zero.
    q00 = y0 * W + x0
    q01 = y0 * W + x1
    q10 = y1 * W + x0
    q11 = y1 * W + x1

    @pl.when(k == 0)
    def _():
        out_ref[...] = jnp.zeros_like(out_ref)

    r = lax.broadcasted_iota(jnp.int32, (TK, 1), 0) + k * TK
    m = ((r == q00).astype(build_dtype) * w00.astype(build_dtype)
         + (r == q01).astype(build_dtype) * w01.astype(build_dtype)
         + (r == q10).astype(build_dtype) * w10.astype(build_dtype)
         + (r == q11).astype(build_dtype) * w11.astype(build_dtype))
    out_ref[0] += jnp.dot(inp_ref[0], m.astype(mm_dtype),
                          preferred_element_type=jnp.float32,
                          precision=precision)

    @pl.when(k == nk - 1)
    def _():
        mask_raw = w00 + w01 + w10 + w11
        mask = jnp.where(mask_raw > 0.999, 1.0, 0.0)
        out_ref[0] = out_ref[0] * mask


# ----------------------------------------------------------------------------
# Wrapper.
# ----------------------------------------------------------------------------
def backward_warp(tensor_input, tensor_flow, *, matmul_dtype=None, _tiles=None):
    """JAX/Pallas equivalent of Backward.forward(tensorInput, tensorFlow).

    tensor_input: (B, C, H, W) float32, tensor_flow: (B, 2, H, W) float32
    returns     : (B, C, H, W) float32
    """
    B, C, H, W = tensor_input.shape
    assert tensor_flow.shape == (B, 2, H, W)
    HW = H * W

    gen = _tpu_generation()
    vmem_cap = _vmem_capacity_bytes(gen)

    if matmul_dtype is None:
        use_bf16_mm = C >= 64          # matmul only dominates at high channel
    else:
        use_bf16_mm = bool(np.dtype(matmul_dtype) == np.dtype(jnp.bfloat16))
    mm_dtype = jnp.bfloat16 if use_bf16_mm else jnp.float32
    mm_elt = 2 if use_bf16_mm else 4
    # bf16 plane build only where the VPU is bf16-native (v6e / v7x).
    bf16_build = use_bf16_mm and gen >= 6
    build_dtype = jnp.bfloat16 if bf16_build else jnp.float32
    plane_elt = 2 if bf16_build else 4
    # f32 path keeps exact bilinear weights through the MXU (parity with torch).
    precision = lax.Precision.DEFAULT if use_bf16_mm else lax.Precision.HIGHEST

    if gen >= 7:
        plane_budget = 28 << 20
    elif gen == 6:
        plane_budget = 48 << 20
    else:
        plane_budget = 16 << 20
    vmem_usable = (vmem_cap * 7) // 8

    if _tiles is not None:
        TQ, TK, k_tiled = _tiles
    else:
        TQ, TK, k_tiled = _pick_tiles(HW, C, plane_elt, mm_elt,
                                      plane_budget, vmem_usable)

    # Source cast hoisted out of the kernel (done once, halves DMA when bf16).
    inp = tensor_input.astype(mm_dtype).reshape(B, C, HW)
    flow = tensor_flow.astype(jnp.float32).reshape(B, 2, HW)
    gx = jnp.broadcast_to(
        jnp.linspace(-1.0, 1.0, W, dtype=jnp.float32)[None, :], (H, W))
    gy = jnp.broadcast_to(
        jnp.linspace(-1.0, 1.0, H, dtype=jnp.float32)[:, None], (H, W))
    base_grid = jnp.stack([gx.reshape(HW), gy.reshape(HW)], axis=0)  # (2, HW)

    # Lane-dense query tiling: pad the destination-pixel axis to a multiple of
    # TQ; padded columns compute harmless in-bounds samples and are sliced off.
    HWq = _round_up(HW, TQ)
    if HWq != HW:
        flow = jnp.pad(flow, ((0, 0), (0, 0), (0, HWq - HW)))
        base_grid = jnp.pad(base_grid, ((0, 0), (0, HWq - HW)))
    NQ = HWq // TQ

    rows = TK if k_tiled else HW
    est = (2 * C * rows * mm_elt
           + (5 if k_tiled else 6) * rows * TQ * plane_elt
           + 2 * (C + 8) * TQ * 4
           + (6 << 20))
    vmem_limit = int(min(max(est, 24 << 20), vmem_usable))

    if not k_tiled:
        kernel = functools.partial(
            _warp_kernel_resident, H=H, W=W, mm_dtype=mm_dtype,
            build_dtype=build_dtype, precision=precision)
        out_flat = pl.pallas_call(
            kernel,
            out_shape=jax.ShapeDtypeStruct((B, C, HWq), jnp.float32),
            grid=(B, NQ),
            in_specs=[
                # Source: constant in q -> fetched once per batch element.
                pl.BlockSpec((1, C, HW), lambda b, q: (b, 0, 0)),
                pl.BlockSpec((1, 2, TQ), lambda b, q: (b, 0, q)),
                pl.BlockSpec((2, TQ), lambda b, q: (0, q)),
            ],
            out_specs=pl.BlockSpec((1, C, TQ), lambda b, q: (b, 0, q)),
            compiler_params=pltpu.CompilerParams(
                dimension_semantics=("parallel", "parallel"),
                vmem_limit_bytes=vmem_limit),
        )(inp, flow, base_grid)
    else:
        # Pad the source axis so TK divides it; padded rows are zero and are
        # never matched by any corner index.
        HWk = _round_up(HW, TK)
        if HWk != HW:
            inp = jnp.pad(inp, ((0, 0), (0, 0), (0, HWk - HW)))
        NK = HWk // TK
        kernel = functools.partial(
            _warp_kernel_ktiled, H=H, W=W, TK=TK, mm_dtype=mm_dtype,
            build_dtype=build_dtype, precision=precision)
        out_flat = pl.pallas_call(
            kernel,
            out_shape=jax.ShapeDtypeStruct((B, C, HWq), jnp.float32),
            grid=(B, NQ, NK),
            in_specs=[
                pl.BlockSpec((1, C, TK), lambda b, q, k: (b, 0, k)),
                pl.BlockSpec((1, 2, TQ), lambda b, q, k: (b, 0, q)),
                pl.BlockSpec((2, TQ), lambda b, q, k: (0, q)),
            ],
            out_specs=pl.BlockSpec((1, C, TQ), lambda b, q, k: (b, 0, q)),
            compiler_params=pltpu.CompilerParams(
                dimension_semantics=("parallel", "parallel", "arbitrary"),
                vmem_limit_bytes=vmem_limit),
        )(inp, flow, base_grid)

    return out_flat[:, :, :HW].reshape(B, C, H, W)


# ----------------------------------------------------------------------------
# Pure-JAX reference (mirrors F.grid_sample bilinear/zeros/align_corners=False).
# ----------------------------------------------------------------------------
def backward_warp_reference(tensor_input, tensor_flow):
    B, C, H, W = tensor_input.shape
    inp = tensor_input.astype(jnp.float32).reshape(B, C, H * W)
    gx = jnp.broadcast_to(
        jnp.linspace(-1.0, 1.0, W, dtype=jnp.float32)[None, :], (H, W))
    gy = jnp.broadcast_to(
        jnp.linspace(-1.0, 1.0, H, dtype=jnp.float32)[:, None], (H, W))
    fx = tensor_flow[:, 0] / ((W - 1.0) / 2.0)
    fy = tensor_flow[:, 1] / ((H - 1.0) / 2.0)
    ix = ((gx[None] + fx + 1.0) * W - 1.0) * 0.5
    iy = ((gy[None] + fy + 1.0) * H - 1.0) * 0.5
    x0 = jnp.floor(ix)
    y0 = jnp.floor(iy)
    wx1 = ix - x0
    wx0 = 1.0 - wx1
    wy1 = iy - y0
    wy0 = 1.0 - wy1
    x0i = x0.astype(jnp.int32)
    y0i = y0.astype(jnp.int32)
    x1i = x0i + 1
    y1i = y0i + 1

    def corner(yi, xi, w):
        valid = (xi >= 0) & (xi <= W - 1) & (yi >= 0) & (yi <= H - 1)
        wv = jnp.where(valid, w, 0.0)                               # (B, H, W)
        q = (jnp.clip(yi, 0, H - 1) * W + jnp.clip(xi, 0, W - 1)).reshape(B, H * W)
        vals = jax.vmap(lambda img, idx: jnp.take(img, idx, axis=1))(inp, q)
        return vals.reshape(B, C, H, W) * wv[:, None], wv

    v00, m00 = corner(y0i, x0i, wy0 * wx0)
    v01, m01 = corner(y0i, x1i, wy0 * wx1)
    v10, m10 = corner(y1i, x0i, wy1 * wx0)
    v11, m11 = corner(y1i, x1i, wy1 * wx1)
    out = v00 + v01 + v10 + v11
    mask = jnp.where((m00 + m01 + m10 + m11) > 0.999, 1.0, 0.0)
    return out * mask[:, None]


if __name__ == "__main__":
    key = jax.random.PRNGKey(0)
    k_img, k_flow, k_img2, k_flow2 = jax.random.split(key, 4)

    # Main demo shape (source-resident path).
    B, C, H, W = 2, 4, 16, 16
    tensor_input = jax.random.normal(k_img, (B, C, H, W), dtype=jnp.float32)
    tensor_flow = 3.0 * jax.random.normal(k_flow, (B, 2, H, W),
                                          dtype=jnp.float32)
    out = jax.jit(backward_warp)(tensor_input, tensor_flow)
    jax.block_until_ready(out)
    assert out.shape == (B, C, H, W)
    ref = backward_warp_reference(tensor_input, tensor_flow)
    assert bool(jnp.allclose(out, ref, atol=1e-3, rtol=1e-3))

    # Non-128-multiple spatial size: exercises query padding (auto tiling) and
    # the K-tiled source-reduction path (forced small tiles).
    B2, C2, H2, W2 = 2, 3, 12, 20
    inp2 = jax.random.normal(k_img2, (B2, C2, H2, W2), dtype=jnp.float32)
    flow2 = 3.0 * jax.random.normal(k_flow2, (B2, 2, H2, W2),
                                    dtype=jnp.float32)
    ref2 = backward_warp_reference(inp2, flow2)

    out2 = jax.jit(backward_warp)(inp2, flow2)
    jax.block_until_ready(out2)
    assert bool(jnp.allclose(out2, ref2, atol=1e-3, rtol=1e-3))

    out2k = jax.jit(functools.partial(backward_warp,
                                      _tiles=(128, 128, True)))(inp2, flow2)
    jax.block_until_ready(out2k)
    assert bool(jnp.allclose(out2k, ref2, atol=1e-3, rtol=1e-3))

    print("KERNEL_OK")
</pallas_src>

<mosaic_0001>
module attributes {stable_mosaic.version = 11 : i64} {
  func.func @_warp_kernel_resident(%arg0: i32, %arg1: i32, %arg2: memref<1x4x256xf32, #tpu.memory_space<vmem>>, %arg3: memref<1x2x256xf32, #tpu.memory_space<vmem>>, %arg4: memref<2x256xf32, #tpu.memory_space<vmem>>, %arg5: memref<1x4x256xf32, #tpu.memory_space<vmem>>) attributes {dimension_semantics = [#tpu.dimension_semantics<parallel>, #tpu.dimension_semantics<parallel>], iteration_bounds = array<i64: 2, 1>, scalar_prefetch = 0 : i64, scratch_operands = 0 : i64, tpu.core_type = #tpu.core_type<tc>, window_params = [{transform_indices = @transform_0, window_bounds = array<i64: 1, 4, 256>}, {transform_indices = @transform_1, window_bounds = array<i64: 1, 2, 256>}, {transform_indices = @transform_2, window_bounds = array<i64: 2, 256>}, {transform_indices = @transform_3, window_bounds = array<i64: 1, 4, 256>}]} {
    %c0 = arith.constant 0 : index
    %c0_0 = arith.constant 0 : index
    %c0_1 = arith.constant 0 : index
    %0 = vector.load %arg3[%c0, %c0_0, %c0_1] : memref<1x2x256xf32, #tpu.memory_space<vmem>>, vector<1x2x256xf32>
    %1 = vector.shape_cast %0 : vector<1x2x256xf32> to vector<2x256xf32>
    %c0_2 = arith.constant 0 : index
    %c0_3 = arith.constant 0 : index
    %2 = vector.load %arg4[%c0_2, %c0_3] : memref<2x256xf32, #tpu.memory_space<vmem>>, vector<2x256xf32>
    %3 = vector.extract_strided_slice %1 {offsets = [0, 0], sizes = [1, 256], strides = [1, 1]} : vector<2x256xf32> to vector<1x256xf32>
    %cst = arith.constant 7.500000e+00 : f32
    %4 = vector.broadcast %cst : f32 to vector<1x256xf32>
    %5 = arith.divf %3, %4 : vector<1x256xf32>
    %6 = vector.extract_strided_slice %1 {offsets = [1, 0], sizes = [1, 256], strides = [1, 1]} : vector<2x256xf32> to vector<1x256xf32>
    %cst_4 = arith.constant 7.500000e+00 : f32
    %7 = vector.broadcast %cst_4 : f32 to vector<1x256xf32>
    %8 = arith.divf %6, %7 : vector<1x256xf32>
    %9 = vector.extract_strided_slice %2 {offsets = [0, 0], sizes = [1, 256], strides = [1, 1]} : vector<2x256xf32> to vector<1x256xf32>
    %10 = arith.addf %9, %5 : vector<1x256xf32>
    %cst_5 = arith.constant 1.000000e+00 : f32
    %11 = vector.broadcast %cst_5 : f32 to vector<1x256xf32>
    %12 = arith.addf %10, %11 : vector<1x256xf32>
    %cst_6 = arith.constant 1.600000e+01 : f32
    %13 = vector.broadcast %cst_6 : f32 to vector<1x256xf32>
    %14 = arith.mulf %12, %13 : vector<1x256xf32>
    %cst_7 = arith.constant 1.000000e+00 : f32
    %15 = vector.broadcast %cst_7 : f32 to vector<1x256xf32>
    %16 = arith.subf %14, %15 : vector<1x256xf32>
    %cst_8 = arith.constant 5.000000e-01 : f32
    %17 = vector.broadcast %cst_8 : f32 to vector<1x256xf32>
    %18 = arith.mulf %16, %17 : vector<1x256xf32>
    %19 = vector.extract_strided_slice %2 {offsets = [1, 0], sizes = [1, 256], strides = [1, 1]} : vector<2x256xf32> to vector<1x256xf32>
    %20 = arith.addf %19, %8 : vector<1x256xf32>
    %cst_9 = arith.constant 1.000000e+00 : f32
    %21 = vector.broadcast %cst_9 : f32 to vector<1x256xf32>
    %22 = arith.addf %20, %21 : vector<1x256xf32>
    %cst_10 = arith.constant 1.600000e+01 : f32
    %23 = vector.broadcast %cst_10 : f32 to vector<1x256xf32>
    %24 = arith.mulf %22, %23 : vector<1x256xf32>
    %cst_11 = arith.constant 1.000000e+00 : f32
    %25 = vector.broadcast %cst_11 : f32 to vector<1x256xf32>
    %26 = arith.subf %24, %25 : vector<1x256xf32>
    %cst_12 = arith.constant 5.000000e-01 : f32
    %27 = vector.broadcast %cst_12 : f32 to vector<1x256xf32>
    %28 = arith.mulf %26, %27 : vector<1x256xf32>
    %29 = math.floor %18 : vector<1x256xf32>
    %30 = math.floor %28 : vector<1x256xf32>
    %31 = arith.subf %18, %29 : vector<1x256xf32>
    %cst_13 = arith.constant 1.000000e+00 : f32
    %32 = vector.broadcast %cst_13 : f32 to vector<1x256xf32>
    %33 = arith.subf %32, %31 : vector<1x256xf32>
    %34 = arith.subf %28, %30 : vector<1x256xf32>
    %cst_14 = arith.constant 1.000000e+00 : f32
    %35 = vector.broadcast %cst_14 : f32 to vector<1x256xf32>
    %36 = arith.subf %35, %34 : vector<1x256xf32>
    %37 = arith.fptosi %29 : vector<1x256xf32> to vector<1x256xi32>
    %38 = arith.fptosi %30 : vector<1x256xf32> to vector<1x256xi32>
    %c1_i32 = arith.constant 1 : i32
    %39 = vector.broadcast %c1_i32 : i32 to vector<1x256xi32>
    %40 = arith.addi %37, %39 : vector<1x256xi32>
    %c1_i32_15 = arith.constant 1 : i32
    %41 = vector.broadcast %c1_i32_15 : i32 to vector<1x256xi32>
    %42 = arith.addi %38, %41 : vector<1x256xi32>
    %c0_i32 = arith.constant 0 : i32
    %43 = vector.broadcast %c0_i32 : i32 to vector<1x256xi32>
    %44 = arith.cmpi sge, %37, %43 : vector<1x256xi32>
    %c15_i32 = arith.constant 15 : i32
    %45 = vector.broadcast %c15_i32 : i32 to vector<1x256xi32>
    %46 = arith.cmpi sle, %37, %45 : vector<1x256xi32>
    %47 = arith.andi %44, %46 : vector<1x256xi1>
    %c0_i32_16 = arith.constant 0 : i32
    %48 = vector.broadcast %c0_i32_16 : i32 to vector<1x256xi32>
    %49 = arith.cmpi sge, %40, %48 : vector<1x256xi32>
    %c15_i32_17 = arith.constant 15 : i32
    %50 = vector.broadcast %c15_i32_17 : i32 to vector<1x256xi32>
    %51 = arith.cmpi sle, %40, %50 : vector<1x256xi32>
    %52 = arith.andi %49, %51 : vector<1x256xi1>
    %c0_i32_18 = arith.constant 0 : i32
    %53 = vector.broadcast %c0_i32_18 : i32 to vector<1x256xi32>
    %54 = arith.cmpi sge, %38, %53 : vector<1x256xi32>
    %c15_i32_19 = arith.constant 15 : i32
    %55 = vector.broadcast %c15_i32_19 : i32 to vector<1x256xi32>
    %56 = arith.cmpi sle, %38, %55 : vector<1x256xi32>
    %57 = arith.andi %54, %56 : vector<1x256xi1>
    %c0_i32_20 = arith.constant 0 : i32
    %58 = vector.broadcast %c0_i32_20 : i32 to vector<1x256xi32>
    %59 = arith.cmpi sge, %42, %58 : vector<1x256xi32>
    %c15_i32_21 = arith.constant 15 : i32
    %60 = vector.broadcast %c15_i32_21 : i32 to vector<1x256xi32>
    %61 = arith.cmpi sle, %42, %60 : vector<1x256xi32>
    %62 = arith.andi %59, %61 : vector<1x256xi1>
    %63 = arith.andi %57, %47 : vector<1x256xi1>
    %64 = arith.mulf %36, %33 : vector<1x256xf32>
    %cst_22 = arith.constant 0.000000e+00 : f32
    %65 = vector.broadcast %cst_22 : f32 to vector<1x256xf32>
    %66 = arith.select %63, %64, %65 : vector<1x256xi1>, vector<1x256xf32>
    %67 = arith.andi %57, %52 : vector<1x256xi1>
    %68 = arith.mulf %36, %31 : vector<1x256xf32>
    %cst_23 = arith.constant 0.000000e+00 : f32
    %69 = vector.broadcast %cst_23 : f32 to vector<1x256xf32>
    %70 = arith.select %67, %68, %69 : vector<1x256xi1>, vector<1x256xf32>
    %71 = arith.andi %62, %47 : vector<1x256xi1>
    %72 = arith.mulf %34, %33 : vector<1x256xf32>
    %cst_24 = arith.constant 0.000000e+00 : f32
    %73 = vector.broadcast %cst_24 : f32 to vector<1x256xf32>
    %74 = arith.select %71, %72, %73 : vector<1x256xi1>, vector<1x256xf32>
    %75 = arith.andi %62, %52 : vector<1x256xi1>
    %76 = arith.mulf %34, %31 : vector<1x256xf32>
    %cst_25 = arith.constant 0.000000e+00 : f32
    %77 = vector.broadcast %cst_25 : f32 to vector<1x256xf32>
    %78 = arith.select %75, %76, %77 : vector<1x256xi1>, vector<1x256xf32>
    %c16_i32 = arith.constant 16 : i32
    %79 = vector.broadcast %c16_i32 : i32 to vector<1x256xi32>
    %80 = arith.muli %38, %79 : vector<1x256xi32>
    %81 = arith.addi %80, %37 : vector<1x256xi32>
    %c0_i32_26 = arith.constant 0 : i32
    %82 = vector.broadcast %c0_i32_26 : i32 to vector<1x256xi32>
    %83 = arith.cmpi slt, %81, %82 : vector<1x256xi32>
    %c256_i32 = arith.constant 256 : i32
    %84 = vector.broadcast %c256_i32 : i32 to vector<1x256xi32>
    %85 = arith.addi %81, %84 : vector<1x256xi32>
    %86 = arith.select %83, %85, %81 : vector<1x256xi1>, vector<1x256xi32>
    %87 = tpu.iota {dimensions = array<i32: 0>} : vector<256x1xi32>
    %88 = vector.broadcast %87 : vector<256x1xi32> to vector<256x256xi32>
    %89 = vector.broadcast %86 : vector<1x256xi32> to vector<256x256xi32>
    %90 = arith.cmpi eq, %88, %89 : vector<256x256xi32>
    %91 = arith.extui %90 : vector<256x256xi1> to vector<256x256xi32>
    %92 = arith.sitofp %91 : vector<256x256xi32> to vector<256x256xf32>
    %c1_i32_27 = arith.constant 1 : i32
    %93 = tpu.dynamic_rotate %92 by %c1_i32_27 dim 0 : vector<256x256xf32>, i32 -> vector<256x256xf32>
    %94 = vector.broadcast %66 : vector<1x256xf32> to vector<256x256xf32>
    %95 = arith.mulf %92, %94 : vector<256x256xf32>
    %96 = vector.broadcast %70 : vector<1x256xf32> to vector<256x256xf32>
    %97 = arith.mulf %93, %96 : vector<256x256xf32>
    %98 = arith.addf %95, %97 : vector<256x256xf32>
    %99 = vector.broadcast %74 : vector<1x256xf32> to vector<256x256xf32>
    %100 = arith.mulf %92, %99 : vector<256x256xf32>
    %101 = vector.broadcast %78 : vector<1x256xf32> to vector<256x256xf32>
    %102 = arith.mulf %93, %101 : vector<256x256xf32>
    %103 = arith.addf %100, %102 : vector<256x256xf32>
    %c16_i32_28 = arith.constant 16 : i32
    %104 = tpu.dynamic_rotate %103 by %c16_i32_28 dim 0 : vector<256x256xf32>, i32 -> vector<256x256xf32>
    %105 = arith.addf %98, %104 : vector<256x256xf32>
    %c0_29 = arith.constant 0 : index
    %c0_30 = arith.constant 0 : index
    %c0_31 = arith.constant 0 : index
    %106 = vector.load %arg2[%c0_29, %c0_30, %c0_31] : memref<1x4x256xf32, #tpu.memory_space<vmem>>, vector<1x4x256xf32>
    %107 = vector.shape_cast %106 : vector<1x4x256xf32> to vector<4x256xf32>
    %cst_32 = arith.constant dense<0.000000e+00> : vector<4x256xf32>
    %108 = tpu.matmul %107, %105, %cst_32 {dimension_numbers = #tpu.dot_dimension_numbers<[1], [0], [0], [1], [0, 0, 1, 1], [], []>, precision = #tpu.contract_precision<fp32>} : vector<4x256xf32>, vector<256x256xf32>, vector<4x256xf32> -> vector<4x256xf32>
    %109 = arith.addf %66, %70 : vector<1x256xf32>
    %110 = arith.addf %109, %74 : vector<1x256xf32>
    %111 = arith.addf %110, %78 : vector<1x256xf32>
    %cst_33 = arith.constant 9.990000e-01 : f32
    %112 = vector.broadcast %cst_33 : f32 to vector<1x256xf32>
    %113 = arith.cmpf ogt, %111, %112 : vector<1x256xf32>
    %cst_34 = arith.constant 1.000000e+00 : f32
    %cst_35 = arith.constant 0.000000e+00 : f32
    %114 = vector.broadcast %cst_34 : f32 to vector<1x256xf32>
    %115 = vector.broadcast %cst_35 : f32 to vector<1x256xf32>
    %116 = arith.select %113, %114, %115 : vector<1x256xi1>, vector<1x256xf32>
    %117 = vector.broadcast %116 : vector<1x256xf32> to vector<4x256xf32>
    %118 = arith.mulf %108, %117 : vector<4x256xf32>
    %c0_36 = arith.constant 0 : index
    %c0_37 = arith.constant 0 : index
    %c0_38 = arith.constant 0 : index
    %119 = vector.load %arg5[%c0_36, %c0_37, %c0_38] : memref<1x4x256xf32, #tpu.memory_space<vmem>>, vector<1x4x256xf32>
    %120 = vector.shape_cast %119 : vector<1x4x256xf32> to vector<4x256xf32>
    %121 = vector.shape_cast %118 : vector<4x256xf32> to vector<1x4x256xf32>
    tpu.vector_store %arg5[%c0_36, %c0_37, %c0_38], %121 {strides = array<i32>} : memref<1x4x256xf32, #tpu.memory_space<vmem>>, vector<1x4x256xf32>,
    return
  }
  func.func @transform_0(%arg0: i32, %arg1: i32) -> (i32, i32, i32) {
    %c0_i32 = arith.constant 0 : i32
    %c0_i32_0 = arith.constant 0 : i32
    %c0_i32_1 = arith.constant 0 : i32
    return %arg0, %c0_i32, %c0_i32_0 : i32, i32, i32
  }
  func.func @transform_1(%arg0: i32, %arg1: i32) -> (i32, i32, i32) {
    %c0_i32 = arith.constant 0 : i32
    %c0_i32_0 = arith.constant 0 : i32
    return %arg0, %c0_i32, %arg1 : i32, i32, i32
  }
  func.func @transform_2(%arg0: i32, %arg1: i32) -> (i32, i32) {
    %c0_i32 = arith.constant 0 : i32
    %c0_i32_0 = arith.constant 0 : i32
    return %c0_i32, %arg1 : i32, i32
  }
  func.func @transform_3(%arg0: i32, %arg1: i32) -> (i32, i32, i32) {
    %c0_i32 = arith.constant 0 : i32
    %c0_i32_0 = arith.constant 0 : i32
    return %arg0, %c0_i32, %arg1 : i32, i32, i32
  }
}

</mosaic_0001>

<llo_original>
// kernel: backward_warp.1
$region0: #{backward_warp.1}
  #allocation0 [shape = 'u32[]', space=smem, size = 0x4, offset = 0x4, fixed_abs, tag = 'smem constant byte address 0x4 - core index']
  #allocation1 [shape = 'u32[72,128]{1,0:T(1,128)}', space=vmem, size = 0x9000, scoped, tag = 'internal scratch']
  %s0 = inlined_call_operand.vmem [shape: f32[2,4,256], index: 0, kind: input, shape index: {}]
  %s1 = inlined_call_operand.vmem [shape: f32[2,2,256], index: 1, kind: input, shape index: {}]
  %s2 = inlined_call_operand.vmem [shape: f32[2,256], index: 2, kind: input, shape index: {}]
  %s3 = inlined_call_operand.vmem [shape: f32[2,4,256], index: 3, kind: output, shape index: {}]
  %s4 = sld [smem:[#allocation0]]
  $region45: #{backward_warp.1} parent=0
    _
  %s6 = ssub.s32 1, %s4
  %s7 = scalar_select 0, %s6, %s4
  loop: start=0, step=1, limit=4
  $region2: #{backward_warp.1} parent=0 // loop_pre_header
    _
  $region3: #{backward_warp.1} parent=0 // loop_header
    %s9 = sphi 0, %s13
    %p10 = scmp.ge.s32.totalorder %s9, 4
    %s16 = sphi 0, %s28
    %s17 = sphi 0, %s24
    %s18 = sphi 0, %s16
    %s19 = sphi 0, %s17
    %s20 = sphi 0, %s18
    %s21 = sphi 0, %s19
    %s31 = sphi 0, %s33
    %s34 = sphi 0, %s31
    %s35 = sphi 0, %s34
    %s51 = sphi 0, %s35
    %s59 = sphi 0, %s61
    %s62 = sphi 0, %s59
    %s63 = sphi 0, %s62
    %s79 = sphi 0, %s63
    %s85 = sphi 0, %s87
    %s88 = sphi 0, %s85
    %s89 = sphi 0, %s88
    %s105 = sphi 0, %s89
    %s113 = sphi 0, %s115
    %s116 = sphi 0, %s113
    %s117 = sphi 0, %s116
    %s133 = sphi 0, %s117
  $region4: #{backward_warp.1} parent=0 // loop_header_branch
    %12 = sbr.rel (%p10) target = $region8
  $region5: #{backward_warp.1} parent=0 // loop_body
    %s14 = ssub.s32 %s9, 1
    %s15 = ssub.s32 %s9, 2
    %s22 = sadd.s32 1, %s17
    %p23 = scmp.ge.s32.totalorder %s22, 1
    %s24 = scalar_select %p23, 0, %s22
    %s25 = sadd.s32 1, %s16
    %s26 = scalar_select %p23, %s25, %s16
    %p27 = scmp.ge.s32.totalorder %s26, 2
    %s28 = scalar_select %p27, 0, %s26
    %s29 = ssub.s32 %s16, %s28
    %p30 = scmp.eq.s32.totalorder %s29, 0
    %s32 = sadd.s32 %s31, 1
    %s33 = scalar_select %p30, %s31, %s32
    %p36 = pneg %p30
    %p37 = scmp.eq.s32.totalorder %s9, 1
    %p38 = por %p36, %p37
    %p39 = scmp.ne.s32.totalorder %s31, %s34
    %p40 = scmp.eq.s32.totalorder %s9, 0
    %p41 = por %p39, %p40
    %p42 = scmp.ne.s32.totalorder %s31, %s34
    %p43 = scmp.eq.s32.totalorder %s14, 1
    %p44 = por %p42, %p43
    %p45 = scmp.ne.s32.totalorder %s34, %s35
    %p46 = scmp.eq.s32.totalorder %s14, 0
    %p47 = por %p45, %p46
    %p48 = scmp.ne.s32.totalorder %s34, %s35
    %p49 = scmp.eq.s32.totalorder %s15, 1
    %p50 = por %p48, %p49
    %p52 = scmp.ne.s32.totalorder %s35, %s51
    %p53 = scmp.eq.s32.totalorder %s15, 0
    %p54 = por %p52, %p53
    %s55 = ssub.s32 %s16, %s28
    %s56 = ssub.s32 %s17, %s24
    %s57 = sor.u32 %s55, %s56
    %p58 = scmp.eq.s32.totalorder %s57, 0
    %s60 = sadd.s32 %s59, 1
    %s61 = scalar_select %p58, %s59, %s60
    %p64 = pneg %p58
    %p65 = scmp.eq.s32.totalorder %s9, 1
    %p66 = por %p64, %p65
    %p67 = scmp.ne.s32.totalorder %s59, %s62
    %p68 = scmp.eq.s32.totalorder %s9, 0
    %p69 = por %p67, %p68
    %p70 = scmp.ne.s32.totalorder %s59, %s62
    %p71 = scmp.eq.s32.totalorder %s14, 1
    %p72 = por %p70, %p71
    %p73 = scmp.ne.s32.totalorder %s62, %s63
    %p74 = scmp.eq.s32.totalorder %s14, 0
    %p75 = por %p73, %p74
    %p76 = scmp.ne.s32.totalorder %s62, %s63
    %p77 = scmp.eq.s32.totalorder %s15, 1
    %p78 = por %p76, %p77
    %p80 = scmp.ne.s32.totalorder %s63, %s79
    %p81 = scmp.eq.s32.totalorder %s15, 0
    %p82 = por %p80, %p81
    %s83 = ssub.s32 %s17, %s24
    %p84 = scmp.eq.s32.totalorder %s83, 0
    %s86 = sadd.s32 %s85, 1
    %s87 = scalar_select %p84, %s85, %s86
    %p90 = pneg %p84
    %p91 = scmp.eq.s32.totalorder %s9, 1
    %p92 = por %p90, %p91
    %p93 = scmp.ne.s32.totalorder %s85, %s88
    %p94 = scmp.eq.s32.totalorder %s9, 0
    %p95 = por %p93, %p94
    %p96 = scmp.ne.s32.totalorder %s85, %s88
    %p97 = scmp.eq.s32.totalorder %s14, 1
    %p98 = por %p96, %p97
    %p99 = scmp.ne.s32.totalorder %s88, %s89
    %p100 = scmp.eq.s32.totalorder %s14, 0
    %p101 = por %p99, %p100
    %p102 = scmp.ne.s32.totalorder %s88, %s89
    %p103 = scmp.eq.s32.totalorder %s15, 1
    %p104 = por %p102, %p103
    %p106 = scmp.ne.s32.totalorder %s89, %s105
    %p107 = scmp.eq.s32.totalorder %s15, 0
    %p108 = por %p106, %p107
    %s109 = ssub.s32 %s16, %s28
    %s110 = ssub.s32 %s17, %s24
    %s111 = sor.u32 %s109, %s110
    %p112 = scmp.eq.s32.totalorder %s111, 0
    %s114 = sadd.s32 %s113, 1
    %s115 = scalar_select %p112, %s113, %s114
    %p118 = pneg %p112
    %p119 = scmp.eq.s32.totalorder %s9, 1
    %p120 = por %p118, %p119
    %p121 = scmp.ne.s32.totalorder %s113, %s116
    %p122 = scmp.eq.s32.totalorder %s9, 0
    %p123 = por %p121, %p122
    %p124 = scmp.ne.s32.totalorder %s113, %s116
    %p125 = scmp.eq.s32.totalorder %s14, 1
    %p126 = por %p124, %p125
    %p127 = scmp.ne.s32.totalorder %s116, %s117
    %p128 = scmp.eq.s32.totalorder %s14, 0
    %p129 = por %p127, %p128
    %p130 = scmp.ne.s32.totalorder %s116, %s117
    %p131 = scmp.eq.s32.totalorder %s15, 1
    %p132 = por %p130, %p131
    %p134 = scmp.ne.s32.totalorder %s117, %s133
    %p135 = scmp.eq.s32.totalorder %s15, 0
    %p136 = por %p134, %p135
    %p137 = scmp.le.s32.totalorder 1, %s9
    %p138 = scmp.lt.s32.totalorder %s9, 3
    %p139 = pnand %p137, %p138
    %p140 = pneg %p139
    // Predicated region
    $region9: #{backward_warp.1} parent=5 // pred_check
      _
    $region10: #{backward_warp.1} parent=5 // pred_check_branch
      %142 = sbr.rel (%p139) target = $region12
    $region11: #{backward_warp.1} parent=5 // pred_region
      %s143 = ssub.s32 %s9, 1
      // Predicated region
      $region13: #{backward_warp.1} parent=11 // pred_check
        %p144 = pneg %p101
      $region14: #{backward_warp.1} parent=11 // pred_check_branch
        %146 = sbr.rel (%p144) target = $region16
      $region15: #{backward_warp.1} parent=11 // pred_region
        %s147 = smul.u32 2, %s19
        %p148 = scmp.lt.s32.totalorder %s147, 1
        %s149 = scalar_select %p148, %s147, 1
        %s150 = smul.addr %s149, 2
        %s151 = scalar_lea.vmem %s2, %s150
        %s152 = smul.u32 2, %s19
      $region16: #{backward_warp.1} parent=11 // pred_fallthru
        _
    $region12: #{backward_warp.1} parent=5 // pred_fallthru
      _
    %p153 = scmp.lt.s32.totalorder %s9, 2
    // Predicated region
    $region17: #{backward_warp.1} parent=5 // pred_check
      %p154 = pneg %p153
    $region18: #{backward_warp.1} parent=5 // pred_check_branch
      %156 = sbr.rel (%p154) target = $region20
    $region19: #{backward_warp.1} parent=5 // pred_region
      // Predicated region
      $region21: #{backward_warp.1} parent=19 // pred_check
        %p157 = pneg %p41
      $region22: #{backward_warp.1} parent=19 // pred_check_branch
        %159 = sbr.rel (%p157) target = $region24
      $region23: #{backward_warp.1} parent=19 // pred_region
        %p160 = scmp.lt.s32.totalorder %s16, 1
        %s161 = scalar_select %p160, %s16, 1
        %s162 = smul.addr %s161, 2
        %s163 = smul.addr %s162, 4
        %s164 = scalar_lea.vmem %s0, %s163
      $region24: #{backward_warp.1} parent=19 // pred_fallthru
        _
      // Predicated region
      $region25: #{backward_warp.1} parent=19 // pred_check
        %p165 = pneg %p69
      $region26: #{backward_warp.1} parent=19 // pred_check_branch
        %167 = sbr.rel (%p165) target = $region28
      $region27: #{backward_warp.1} parent=19 // pred_region
        %s168 = smul.u32 2, %s17
        %p169 = scmp.lt.s32.totalorder %s16, 1
        %s170 = scalar_select %p169, %s16, 1
        %p171 = scmp.lt.s32.totalorder %s168, 1
        %s172 = scalar_select %p171, %s168, 1
        %s173 = smul.addr %s170, 2
        %s174 = sadd.s32 %s172, %s173
        %s175 = smul.addr %s174, 2
        %s176 = scalar_lea.vmem %s1, %s175
        %s177 = smul.u32 2, %s17
      $region28: #{backward_warp.1} parent=19 // pred_fallthru
        _
    $region20: #{backward_warp.1} parent=5 // pred_fallthru
      _
    %p178 = scmp.le.s32.totalorder 1, %s9
    %p179 = scmp.lt.s32.totalorder %s9, 3
    %p180 = pnand %p178, %p179
    %p181 = pneg %p180
    // Predicated region
    $region29: #{backward_warp.1} parent=5 // pred_check
      _
    $region30: #{backward_warp.1} parent=5 // pred_check_branch
      %183 = sbr.rel (%p180) target = $region32
    $region31: #{backward_warp.1} parent=5 // pred_region
      %s184 = ssub.s32 %s9, 1
      %p185 = scmp.lt.s32.totalorder %s18, 1
      %s186 = scalar_select %p185, %s18, 1
      %s187 = smul.addr %s186, 2
      %s188 = smul.addr %s187, 4
      %s189 = scalar_lea.vmem %s0, %s188
      %p190 = pneg %p47
      %p191 = pneg %p44
      %s192 = smul.u32 2, %s19
      %p193 = scmp.lt.s32.totalorder %s18, 1
      %s194 = scalar_select %p193, %s18, 1
      %p195 = scmp.lt.s32.totalorder %s192, 1
      %s196 = scalar_select %p195, %s192, 1
      %s197 = smul.addr %s194, 2
      %s198 = sadd.s32 %s196, %s197
      %s199 = smul.addr %s198, 2
      %s200 = scalar_lea.vmem %s1, %s199
      %p201 = pneg %p75
      %p202 = pneg %p72
      %s203 = smul.u32 2, %s19
      %p204 = scmp.lt.s32.totalorder %s203, 1
      %s205 = scalar_select %p204, %s203, 1
      %s206 = smul.addr %s205, 2
      %s207 = scalar_lea.vmem %s2, %s206
      %p208 = pneg %p101
      %p209 = pneg %p98
      %p210 = pneg %p129
      %p211 = pneg %p126
      %s212 = smul.u32 2, %s19
      %p213 = scmp.lt.s32.totalorder %s18, 1
      %s214 = scalar_select %p213, %s18, 1
      %p215 = scmp.lt.s32.totalorder %s212, 1
      %s216 = scalar_select %p215, %s212, 1
      %s217 = smul.addr %s214, 2
      %s218 = sadd.s32 %s216, %s217
      %s219 = smul.addr %s218, 4
      %s220 = scalar_lea.vmem %s3, %s219
      %p221 = scmp.lt.s32.totalorder %s18, 1
      %s222 = scalar_select %p221, %s18, 1
      %s223 = smul.addr %s222, 2
      %s224 = smul.addr %s223, 4
      %s225 = scalar_lea.vmem %s0, %s224
      %s226 = smul.u32 2, %s19
      %p227 = scmp.lt.s32.totalorder %s18, 1
      %s228 = scalar_select %p227, %s18, 1
      %p229 = scmp.lt.s32.totalorder %s226, 1
      %s230 = scalar_select %p229, %s226, 1
      %s231 = smul.addr %s228, 2
      %s232 = sadd.s32 %s230, %s231
      %s233 = smul.addr %s232, 2
      %s234 = scalar_lea.vmem %s1, %s233
      %s235 = smul.u32 2, %s19
      %s236 = smul.u32 2, %s19
      %p237 = scmp.lt.s32.totalorder %s236, 1
      %s238 = scalar_select %p237, %s236, 1
      %s239 = smul.addr %s238, 2
      %s240 = scalar_lea.vmem %s2, %s239
      %s241 = smul.u32 2, %s19
      %s242 = smul.u32 2, %s19
      %p243 = scmp.lt.s32.totalorder %s18, 1
      %s244 = scalar_select %p243, %s18, 1
      %p245 = scmp.lt.s32.totalorder %s242, 1
      %s246 = scalar_select %p245, %s242, 1
      %s247 = smul.addr %s244, 2
      %s248 = sadd.s32 %s246, %s247
      %s249 = smul.addr %s248, 4
      %s250 = scalar_lea.vmem %s3, %s249
      %s251 = smul.u32 2, %s19
      %v252 = vld [vmem:[%s234] sm:$0xf]
      %v253 = vld [vmem:[%s240] sm:$0xf]
      %v254 = vrcp.pop 7.5
      %v255 = vmul.f32 7.5, %v254
      %v256 = vsub.f32 1.0, %v255
      %v257 = vmul.f32 %v254, %v256
      %v258 = vadd.f32 %v254, %v257
      %vm259 = vweird.f32 %v254
      %v260 = vsel %vm259, %v254, %v258
      %v261 = vmul.f32 %v252, %v260
      %v262 = vadd.f32 %v253, %v261
      %v263 = vadd.f32 %v262, 1.0
      %v264 = vmul.f32 %v263, 16.0
      %v265 = vsub.f32 %v264, 1.0
      %v266 = vmul.f32 %v265, 0.5
      %v267 = vfloor.f32 %v266
      %v268 = vsub.f32 %v266, %v267
      %v269 = vsub.f32 1.0, %v268
      %v270 = vcvt.f32.s32.to.zero.pseudo %v267
      %v271 = vadd.s32 %v270, 1
      %vm272 = vcmp.ge.s32.totalorder %v270, 0
      %vm273 = vcmp.le.s32.totalorder %v270, 15
      %vm274 = vmand %vm272, %vm273
      %vm275 = vcmp.ge.s32.totalorder %v271, 0
      %vm276 = vcmp.le.s32.totalorder %v271, 15
      %vm277 = vmand %vm275, %vm276
      %v278 = vsel %vm274, 1, 0
      %v279 = vrot.slane %v278, 7
      %vm280 = vcmp.ne.s32.totalorder %v279, 0
      %vm281 = vmand %vm274, %vm280
      %v283 = vrot.slane %v269, 7
      %v285 = vmul.f32 %v269, %v283
      %v286 = vsel %vm281, %v285, 0.0
      %v287 = vsel %vm277, 1, 0
      %v288 = vrot.slane %v287, 7
      %vm289 = vcmp.ne.s32.totalorder %v288, 0
      %vm290 = vmand %vm274, %vm289
      %v292 = vrot.slane %v268, 7
      %v294 = vmul.f32 %v269, %v292
      %v295 = vsel %vm290, %v294, 0.0
      %vm296 = vmand %vm277, %vm280
      %v297 = vmul.f32 %v268, %v283
      %v298 = vsel %vm296, %v297, 0.0
      %vm299 = vmand %vm277, %vm289
      %v300 = vmul.f32 %v268, %v292
      %v301 = vsel %vm299, %v300, 0.0
      %v302 = vmul.u32 %v270, 16
      %v303 = vrot.slane %v270, 7
      %v304 = vadd.s32 %v302, %v303
      %vm305 = vcmp.lt.s32.totalorder %v304, 0
      %v306 = vadd.s32 %v304, 256
      %v307 = vsel %vm305, %v306, %v304
      %v308 = vlaneseq
      %v309 = vshrl.u32 %v308, 7
      %v310 = vadd.s32 %v309, 8
      %v311 = vadd.s32 %v309, 16
      %v312 = vadd.s32 %v309, 24
      %v313 = vadd.s32 %v309, 32
      %v314 = vadd.s32 %v309, 40
      %v315 = vadd.s32 %v309, 48
      %v316 = vadd.s32 %v309, 56
      %v317 = vadd.s32 %v309, 64
      %v318 = vadd.s32 %v309, 72
      %v319 = vadd.s32 %v309, 80
      %v320 = vadd.s32 %v309, 88
      %v321 = vadd.s32 %v309, 96
      %v322 = vadd.s32 %v309, 104
      %v323 = vadd.s32 %v309, 112
      %v324 = vadd.s32 %v309, 120
      %v325 = vadd.s32 %v309, 128
      %v326 = vadd.s32 %v309, 136
      %v327 = vadd.s32 %v309, 144
      %v328 = vadd.s32 %v309, 152
      %v329 = vadd.s32 %v309, 160
      %v330 = vadd.s32 %v309, 168
      %v331 = vadd.s32 %v309, 176
      %v332 = vadd.s32 %v309, 184
      %v333 = vadd.s32 %v309, 192
      %v334 = vadd.s32 %v309, 200
      %v335 = vadd.s32 %v309, 208
      %v336 = vadd.s32 %v309, 216
      %v337 = vadd.s32 %v309, 224
      %v338 = vadd.s32 %v309, 232
      %v339 = vadd.s32 %v309, 240
      %v340 = vadd.s32 %v309, 248
      %v341 = vperm.slane %v307, 1
      %v342 = vperm.slane %v307, 3
      %v343 = vperm.slane %v341, 1
      %v344 = vperm.slane %v342, 1
      %vm345 = vcmp.eq.s32.totalorder %v309, %v343
      %vm346 = vcmp.eq.s32.totalorder %v309, %v344
      %vm347 = vcmp.eq.s32.totalorder %v310, %v343
      %vm348 = vcmp.eq.s32.totalorder %v310, %v344
      %vm349 = vcmp.eq.s32.totalorder %v311, %v343
      %vm350 = vcmp.eq.s32.totalorder %v311, %v344
      %vm351 = vcmp.eq.s32.totalorder %v312, %v343
      %vm352 = vcmp.eq.s32.totalorder %v312, %v344
      %vm353 = vcmp.eq.s32.totalorder %v313, %v343
      %vm354 = vcmp.eq.s32.totalorder %v313, %v344
      %vm355 = vcmp.eq.s32.totalorder %v314, %v343
      %vm356 = vcmp.eq.s32.totalorder %v314, %v344
      %vm357 = vcmp.eq.s32.totalorder %v315, %v343
      %vm358 = vcmp.eq.s32.totalorder %v315, %v344
      %vm359 = vcmp.eq.s32.totalorder %v316, %v343
      %vm360 = vcmp.eq.s32.totalorder %v316, %v344
      %vm361 = vcmp.eq.s32.totalorder %v317, %v343
      %vm362 = vcmp.eq.s32.totalorder %v317, %v344
      %vm363 = vcmp.eq.s32.totalorder %v318, %v343
      %vm364 = vcmp.eq.s32.totalorder %v318, %v344
      %vm365 = vcmp.eq.s32.totalorder %v319, %v343
      %vm366 = vcmp.eq.s32.totalorder %v319, %v344
      %vm367 = vcmp.eq.s32.totalorder %v320, %v343
      %vm368 = vcmp.eq.s32.totalorder %v320, %v344
      %vm369 = vcmp.eq.s32.totalorder %v321, %v343
      %vm370 = vcmp.eq.s32.totalorder %v321, %v344
      %vm371 = vcmp.eq.s32.totalorder %v322, %v343
      %vm372 = vcmp.eq.s32.totalorder %v322, %v344
      %vm373 = vcmp.eq.s32.totalorder %v323, %v343
      %vm374 = vcmp.eq.s32.totalorder %v323, %v344
      %vm375 = vcmp.eq.s32.totalorder %v324, %v343
      %vm376 = vcmp.eq.s32.totalorder %v324, %v344
      %vm377 = vcmp.eq.s32.totalorder %v325, %v343
      %vm378 = vcmp.eq.s32.totalorder %v325, %v344
      %vm379 = vcmp.eq.s32.totalorder %v326, %v343
      %vm380 = vcmp.eq.s32.totalorder %v326, %v344
      %vm381 = vcmp.eq.s32.totalorder %v327, %v343
      %vm382 = vcmp.eq.s32.totalorder %v327, %v344
      %vm383 = vcmp.eq.s32.totalorder %v328, %v343
      %vm384 = vcmp.eq.s32.totalorder %v328, %v344
      %vm385 = vcmp.eq.s32.totalorder %v329, %v343
      %vm386 = vcmp.eq.s32.totalorder %v329, %v344
      %vm387 = vcmp.eq.s32.totalorder %v330, %v343
      %vm388 = vcmp.eq.s32.totalorder %v330, %v344
      %vm389 = vcmp.eq.s32.totalorder %v331, %v343
      %vm390 = vcmp.eq.s32.totalorder %v331, %v344
      %vm391 = vcmp.eq.s32.totalorder %v332, %v343
      %vm392 = vcmp.eq.s32.totalorder %v332, %v344
      %vm393 = vcmp.eq.s32.totalorder %v333, %v343
      %vm394 = vcmp.eq.s32.totalorder %v333, %v344
      %vm395 = vcmp.eq.s32.totalorder %v334, %v343
      %vm396 = vcmp.eq.s32.totalorder %v334, %v344
      %vm397 = vcmp.eq.s32.totalorder %v335, %v343
      %vm398 = vcmp.eq.s32.totalorder %v335, %v344
      %vm399 = vcmp.eq.s32.totalorder %v336, %v343
      %vm400 = vcmp.eq.s32.totalorder %v336, %v344
      %vm401 = vcmp.eq.s32.totalorder %v337, %v343
      %vm402 = vcmp.eq.s32.totalorder %v337, %v344
      %vm403 = vcmp.eq.s32.totalorder %v338, %v343
      %vm404 = vcmp.eq.s32.totalorder %v338, %v344
      %vm405 = vcmp.eq.s32.totalorder %v339, %v343
      %vm406 = vcmp.eq.s32.totalorder %v339, %v344
      %vm407 = vcmp.eq.s32.totalorder %v340, %v343
      %vm408 = vcmp.eq.s32.totalorder %v340, %v344
      %v409 = vsel %vm345, 1, 0
      %v410 = vsel %vm346, 1, 0
      %v411 = vsel %vm347, 1, 0
      %v412 = vsel %vm348, 1, 0
      %v413 = vsel %vm349, 1, 0
      %v414 = vsel %vm350, 1, 0
      %v415 = vsel %vm351, 1, 0
      %v416 = vsel %vm352, 1, 0
      %v417 = vsel %vm353, 1, 0
      %v418 = vsel %vm354, 1, 0
      %v419 = vsel %vm355, 1, 0
      %v420 = vsel %vm356, 1, 0
      %v421 = vsel %vm357, 1, 0
      %v422 = vsel %vm358, 1, 0
      %v423 = vsel %vm359, 1, 0
      %v424 = vsel %vm360, 1, 0
      %v425 = vsel %vm361, 1, 0
      %v426 = vsel %vm362, 1, 0
      %v427 = vsel %vm363, 1, 0
      %v428 = vsel %vm364, 1, 0
      %v429 = vsel %vm365, 1, 0
      %v430 = vsel %vm366, 1, 0
      %v431 = vsel %vm367, 1, 0
      %v432 = vsel %vm368, 1, 0
      %v433 = vsel %vm369, 1, 0
      %v434 = vsel %vm370, 1, 0
      %v435 = vsel %vm371, 1, 0
      %v436 = vsel %vm372, 1, 0
      %v437 = vsel %vm373, 1, 0
      %v438 = vsel %vm374, 1, 0
      %v439 = vsel %vm375, 1, 0
      %v440 = vsel %vm376, 1, 0
      %v441 = vsel %vm377, 1, 0
      %v442 = vsel %vm378, 1, 0
      %v443 = vsel %vm379, 1, 0
      %v444 = vsel %vm380, 1, 0
      %v445 = vsel %vm381, 1, 0
      %v446 = vsel %vm382, 1, 0
      %v447 = vsel %vm383, 1, 0
      %v448 = vsel %vm384, 1, 0
      %v449 = vsel %vm385, 1, 0
      %v450 = vsel %vm386, 1, 0
      %v451 = vsel %vm387, 1, 0
      %v452 = vsel %vm388, 1, 0
      %v453 = vsel %vm389, 1, 0
      %v454 = vsel %vm390, 1, 0
      %v455 = vsel %vm391, 1, 0
      %v456 = vsel %vm392, 1, 0
      %v457 = vsel %vm393, 1, 0
      %v458 = vsel %vm394, 1, 0
      %v459 = vsel %vm395, 1, 0
      %v460 = vsel %vm396, 1, 0
      %v461 = vsel %vm397, 1, 0
      %v462 = vsel %vm398, 1, 0
      %v463 = vsel %vm399, 1, 0
      %v464 = vsel %vm400, 1, 0
      %v465 = vsel %vm401, 1, 0
      %v466 = vsel %vm402, 1, 0
      %v467 = vsel %vm403, 1, 0
      %v468 = vsel %vm404, 1, 0
      %v469 = vsel %vm405, 1, 0
      %v470 = vsel %vm406, 1, 0
      %v471 = vsel %vm407, 1, 0
      %v472 = vsel %vm408, 1, 0
      %v473 = vcvt.s32.f32 %v409
      %v474 = vcvt.s32.f32 %v410
      %v475 = vcvt.s32.f32 %v411
      %v476 = vcvt.s32.f32 %v412
      %v477 = vcvt.s32.f32 %v413
      %v478 = vcvt.s32.f32 %v414
      %v479 = vcvt.s32.f32 %v415
      %v480 = vcvt.s32.f32 %v416
      %v481 = vcvt.s32.f32 %v417
      %v482 = vcvt.s32.f32 %v418
      %v483 = vcvt.s32.f32 %v419
      %v484 = vcvt.s32.f32 %v420
      %v485 = vcvt.s32.f32 %v421
      %v486 = vcvt.s32.f32 %v422
      %v487 = vcvt.s32.f32 %v423
      %v488 = vcvt.s32.f32 %v424
      %v489 = vcvt.s32.f32 %v425
      %v490 = vcvt.s32.f32 %v426
      %v491 = vcvt.s32.f32 %v427
      %v492 = vcvt.s32.f32 %v428
      %v493 = vcvt.s32.f32 %v429
      %v494 = vcvt.s32.f32 %v430
      %v495 = vcvt.s32.f32 %v431
      %v496 = vcvt.s32.f32 %v432
      %v497 = vcvt.s32.f32 %v433
      %v498 = vcvt.s32.f32 %v434
      %v499 = vcvt.s32.f32 %v435
      %v500 = vcvt.s32.f32 %v436
      %v501 = vcvt.s32.f32 %v437
      %v502 = vcvt.s32.f32 %v438
      %v503 = vcvt.s32.f32 %v439
      %v504 = vcvt.s32.f32 %v440
      %v505 = vcvt.s32.f32 %v441
      %v506 = vcvt.s32.f32 %v442
      %v507 = vcvt.s32.f32 %v443
      %v508 = vcvt.s32.f32 %v444
      %v509 = vcvt.s32.f32 %v445
      %v510 = vcvt.s32.f32 %v446
      %v511 = vcvt.s32.f32 %v447
      %v512 = vcvt.s32.f32 %v448
      %v513 = vcvt.s32.f32 %v449
      %v514 = vcvt.s32.f32 %v450
      %v515 = vcvt.s32.f32 %v451
      %v516 = vcvt.s32.f32 %v452
      %v517 = vcvt.s32.f32 %v453
      %v518 = vcvt.s32.f32 %v454
      %v519 = vcvt.s32.f32 %v455
      %v520 = vcvt.s32.f32 %v456
      %v521 = vcvt.s32.f32 %v457
      %v522 = vcvt.s32.f32 %v458
      %v523 = vcvt.s32.f32 %v459
      %v524 = vcvt.s32.f32 %v460
      %v525 = vcvt.s32.f32 %v461
      %v526 = vcvt.s32.f32 %v462
      %v527 = vcvt.s32.f32 %v463
      %v528 = vcvt.s32.f32 %v464
      %v529 = vcvt.s32.f32 %v465
      %v530 = vcvt.s32.f32 %v466
      %v531 = vcvt.s32.f32 %v467
      %v532 = vcvt.s32.f32 %v468
      %v533 = vcvt.s32.f32 %v469
      %v534 = vcvt.s32.f32 %v470
      %v535 = vcvt.s32.f32 %v471
      %v536 = vcvt.s32.f32 %v472
      %v537 = vrot.slane %v473, 7
      %v538 = vrot.slane %v474, 7
      %v539 = vrot.slane %v475, 7
      %v540 = vrot.slane %v476, 7
      %v541 = vrot.slane %v477, 7
      %v542 = vrot.slane %v478, 7
      %v543 = vrot.slane %v479, 7
      %v544 = vrot.slane %v480, 7
      %v545 = vrot.slane %v481, 7
      %v546 = vrot.slane %v482, 7
      %v547 = vrot.slane %v483, 7
      %v548 = vrot.slane %v484, 7
      %v549 = vrot.slane %v485, 7
      %v550 = vrot.slane %v486, 7
      %v551 = vrot.slane %v487, 7
      %v552 = vrot.slane %v488, 7
      %v553 = vrot.slane %v489, 7
      %v554 = vrot.slane %v490, 7
      %v555 = vrot.slane %v491, 7
      %v556 = vrot.slane %v492, 7
      %v557 = vrot.slane %v493, 7
      %v558 = vrot.slane %v494, 7
      %v559 = vrot.slane %v495, 7
      %v560 = vrot.slane %v496, 7
      %v561 = vrot.slane %v497, 7
      %v562 = vrot.slane %v498, 7
      %v563 = vrot.slane %v499, 7
      %v564 = vrot.slane %v500, 7
      %v565 = vrot.slane %v501, 7
      %v566 = vrot.slane %v502, 7
      %v567 = vrot.slane %v503, 7
      %v568 = vrot.slane %v504, 7
      %v569 = vrot.slane %v505, 7
      %v570 = vrot.slane %v506, 7
      %v571 = vrot.slane %v507, 7
      %v572 = vrot.slane %v508, 7
      %v573 = vrot.slane %v509, 7
      %v574 = vrot.slane %v510, 7
      %v575 = vrot.slane %v511, 7
      %v576 = vrot.slane %v512, 7
      %v577 = vrot.slane %v513, 7
      %v578 = vrot.slane %v514, 7
      %v579 = vrot.slane %v515, 7
      %v580 = vrot.slane %v516, 7
      %v581 = vrot.slane %v517, 7
      %v582 = vrot.slane %v518, 7
      %v583 = vrot.slane %v519, 7
      %v584 = vrot.slane %v520, 7
      %v585 = vrot.slane %v521, 7
      %v586 = vrot.slane %v522, 7
      %v587 = vrot.slane %v523, 7
      %v588 = vrot.slane %v524, 7
      %v589 = vrot.slane %v525, 7
      %v590 = vrot.slane %v526, 7
      %v591 = vrot.slane %v527, 7
      %v592 = vrot.slane %v528, 7
      %v593 = vrot.slane %v529, 7
      %v594 = vrot.slane %v530, 7
      %v595 = vrot.slane %v531, 7
      %v596 = vrot.slane %v532, 7
      %v597 = vrot.slane %v533, 7
      %v598 = vrot.slane %v534, 7
      %v599 = vrot.slane %v535, 7
      %v600 = vrot.slane %v536, 7
      %vm601 = vcmp.lt.s32.totalorder %v309, 1
      %v602 = vsel %vm601, %v597, %v599
      %v603 = vsel %vm601, %v598, %v600
      %v604 = vsel %vm601, %v595, %v597
      %v605 = vsel %vm601, %v596, %v598
      %v606 = vsel %vm601, %v593, %v595
      %v607 = vsel %vm601, %v594, %v596
      %v608 = vsel %vm601, %v591, %v593
      %v609 = vsel %vm601, %v592, %v594
      %v610 = vsel %vm601, %v589, %v591
      %v611 = vsel %vm601, %v590, %v592
      %v612 = vsel %vm601, %v587, %v589
      %v613 = vsel %vm601, %v588, %v590
      %v614 = vsel %vm601, %v585, %v587
      %v615 = vsel %vm601, %v586, %v588
      %v616 = vsel %vm601, %v583, %v585
      %v617 = vsel %vm601, %v584, %v586
      %v618 = vsel %vm601, %v581, %v583
      %v619 = vsel %vm601, %v582, %v584
      %v620 = vsel %vm601, %v579, %v581
      %v621 = vsel %vm601, %v580, %v582
      %v622 = vsel %vm601, %v577, %v579
      %v623 = vsel %vm601, %v578, %v580
      %v624 = vsel %vm601, %v575, %v577
      %v625 = vsel %vm601, %v576, %v578
      %v626 = vsel %vm601, %v573, %v575
      %v627 = vsel %vm601, %v574, %v576
      %v628 = vsel %vm601, %v571, %v573
      %v629 = vsel %vm601, %v572, %v574
      %v630 = vsel %vm601, %v569, %v571
      %v631 = vsel %vm601, %v570, %v572
      %v632 = vsel %vm601, %v567, %v569
      %v633 = vsel %vm601, %v568, %v570
      %v634 = vsel %vm601, %v565, %v567
      %v635 = vsel %vm601, %v566, %v568
      %v636 = vsel %vm601, %v563, %v565
      %v637 = vsel %vm601, %v564, %v566
      %v638 = vsel %vm601, %v561, %v563
      %v639 = vsel %vm601, %v562, %v564
      %v640 = vsel %vm601, %v559, %v561
      %v641 = vsel %vm601, %v560, %v562
      %v642 = vsel %vm601, %v557, %v559
      %v643 = vsel %vm601, %v558, %v560
      %v644 = vsel %vm601, %v555, %v557
      %v645 = vsel %vm601, %v556, %v558
      %v646 = vsel %vm601, %v553, %v555
      %v647 = vsel %vm601, %v554, %v556
      %v648 = vsel %vm601, %v551, %v553
      %v649 = vsel %vm601, %v552, %v554
      %v650 = vsel %vm601, %v549, %v551
      %v651 = vsel %vm601, %v550, %v552
      %v652 = vsel %vm601, %v547, %v549
      %v653 = vsel %vm601, %v548, %v550
      %v654 = vsel %vm601, %v545, %v547
      %v655 = vsel %vm601, %v546, %v548
      %v656 = vsel %vm601, %v543, %v545
      %v657 = vsel %vm601, %v544, %v546
      %v658 = vsel %vm601, %v541, %v543
      %v659 = vsel %vm601, %v542, %v544
      %v660 = vsel %vm601, %v539, %v541
      %v661 = vsel %vm601, %v540, %v542
      %v662 = vsel %vm601, %v537, %v539
      %v663 = vsel %vm601, %v538, %v540
      %v664 = vsel %vm601, %v599, %v537
      %v665 = vsel %vm601, %v600, %v538
      %v667 = vperm.slane %v286, 1
      %v668 = vperm.slane %v286, 3
      %v671 = vperm.slane %v667, 1
      %v672 = vperm.slane %v668, 1
      %v673 = vmul.f32 %v473, %v671
      %v674 = vmul.f32 %v474, %v672
      %v675 = vmul.f32 %v475, %v671
      %v676 = vmul.f32 %v476, %v672
      %v677 = vmul.f32 %v477, %v671
      %v678 = vmul.f32 %v478, %v672
      %v679 = vmul.f32 %v479, %v671
      %v680 = vmul.f32 %v480, %v672
      %v681 = vmul.f32 %v481, %v671
      %v682 = vmul.f32 %v482, %v672
      %v683 = vmul.f32 %v483, %v671
      %v684 = vmul.f32 %v484, %v672
      %v685 = vmul.f32 %v485, %v671
      %v686 = vmul.f32 %v486, %v672
      %v687 = vmul.f32 %v487, %v671
      %v688 = vmul.f32 %v488, %v672
      %v689 = vmul.f32 %v489, %v671
      %v690 = vmul.f32 %v490, %v672
      %v691 = vmul.f32 %v491, %v671
      %v692 = vmul.f32 %v492, %v672
      %v693 = vmul.f32 %v493, %v671
      %v694 = vmul.f32 %v494, %v672
      %v695 = vmul.f32 %v495, %v671
      %v696 = vmul.f32 %v496, %v672
      %v697 = vmul.f32 %v497, %v671
      %v698 = vmul.f32 %v498, %v672
      %v699 = vmul.f32 %v499, %v671
      %v700 = vmul.f32 %v500, %v672
      %v701 = vmul.f32 %v501, %v671
      %v702 = vmul.f32 %v502, %v672
      %v703 = vmul.f32 %v503, %v671
      %v704 = vmul.f32 %v504, %v672
      %v705 = vmul.f32 %v505, %v671
      %v706 = vmul.f32 %v506, %v672
      %v707 = vmul.f32 %v507, %v671
      %v708 = vmul.f32 %v508, %v672
      %v709 = vmul.f32 %v509, %v671
      %v710 = vmul.f32 %v510, %v672
      %v711 = vmul.f32 %v511, %v671
      %v712 = vmul.f32 %v512, %v672
      %v713 = vmul.f32 %v513, %v671
      %v714 = vmul.f32 %v514, %v672
      %v715 = vmul.f32 %v515, %v671
      %v716 = vmul.f32 %v516, %v672
      %v717 = vmul.f32 %v517, %v671
      %v718 = vmul.f32 %v518, %v672
      %v719 = vmul.f32 %v519, %v671
      %v720 = vmul.f32 %v520, %v672
      %v721 = vmul.f32 %v521, %v671
      %v722 = vmul.f32 %v522, %v672
      %v723 = vmul.f32 %v523, %v671
      %v724 = vmul.f32 %v524, %v672
      %v725 = vmul.f32 %v525, %v671
      %v726 = vmul.f32 %v526, %v672
      %v727 = vmul.f32 %v527, %v671
      %v728 = vmul.f32 %v528, %v672
      %v729 = vmul.f32 %v529, %v671
      %v730 = vmul.f32 %v530, %v672
      %v731 = vmul.f32 %v531, %v671
      %v732 = vmul.f32 %v532, %v672
      %v733 = vmul.f32 %v533, %v671
      %v734 = vmul.f32 %v534, %v672
      %v735 = vmul.f32 %v535, %v671
      %v736 = vmul.f32 %v536, %v672
      %v738 = vperm.slane %v295, 1
      %v739 = vperm.slane %v295, 3
      %v742 = vperm.slane %v738, 1
      %v743 = vperm.slane %v739, 1
      %v744 = vmul.f32 %v664, %v742
      %v745 = vmul.f32 %v665, %v743
      %v746 = vmul.f32 %v662, %v742
      %v747 = vmul.f32 %v663, %v743
      %v748 = vmul.f32 %v660, %v742
      %v749 = vmul.f32 %v661, %v743
      %v750 = vmul.f32 %v658, %v742
      %v751 = vmul.f32 %v659, %v743
      %v752 = vmul.f32 %v656, %v742
      %v753 = vmul.f32 %v657, %v743
      %v754 = vmul.f32 %v654, %v742
      %v755 = vmul.f32 %v655, %v743
      %v756 = vmul.f32 %v652, %v742
      %v757 = vmul.f32 %v653, %v743
      %v758 = vmul.f32 %v650, %v742
      %v759 = vmul.f32 %v651, %v743
      %v760 = vmul.f32 %v648, %v742
      %v761 = vmul.f32 %v649, %v743
      %v762 = vmul.f32 %v646, %v742
      %v763 = vmul.f32 %v647, %v743
      %v764 = vmul.f32 %v644, %v742
      %v765 = vmul.f32 %v645, %v743
      %v766 = vmul.f32 %v642, %v742
      %v767 = vmul.f32 %v643, %v743
      %v768 = vmul.f32 %v640, %v742
      %v769 = vmul.f32 %v641, %v743
      %v770 = vmul.f32 %v638, %v742
      %v771 = vmul.f32 %v639, %v743
      %v772 = vmul.f32 %v636, %v742
      %v773 = vmul.f32 %v637, %v743
      %v774 = vmul.f32 %v634, %v742
      %v775 = vmul.f32 %v635, %v743
      %v776 = vmul.f32 %v632, %v742
      %v777 = vmul.f32 %v633, %v743
      %v778 = vmul.f32 %v630, %v742
      %v779 = vmul.f32 %v631, %v743
      %v780 = vmul.f32 %v628, %v742
      %v781 = vmul.f32 %v629, %v743
      %v782 = vmul.f32 %v626, %v742
      %v783 = vmul.f32 %v627, %v743
      %v784 = vmul.f32 %v624, %v742
      %v785 = vmul.f32 %v625, %v743
      %v786 = vmul.f32 %v622, %v742
      %v787 = vmul.f32 %v623, %v743
      %v788 = vmul.f32 %v620, %v742
      %v789 = vmul.f32 %v621, %v743
      %v790 = vmul.f32 %v618, %v742
      %v791 = vmul.f32 %v619, %v743
      %v792 = vmul.f32 %v616, %v742
      %v793 = vmul.f32 %v617, %v743
      %v794 = vmul.f32 %v614, %v742
      %v795 = vmul.f32 %v615, %v743
      %v796 = vmul.f32 %v612, %v742
      %v797 = vmul.f32 %v613, %v743
      %v798 = vmul.f32 %v610, %v742
      %v799 = vmul.f32 %v611, %v743
      %v800 = vmul.f32 %v608, %v742
      %v801 = vmul.f32 %v609, %v743
      %v802 = vmul.f32 %v606, %v742
      %v803 = vmul.f32 %v607, %v743
      %v804 = vmul.f32 %v604, %v742
      %v805 = vmul.f32 %v605, %v743
      %v806 = vmul.f32 %v602, %v742
      %v807 = vmul.f32 %v603, %v743
      %v808 = vadd.f32 %v673, %v744
      %v809 = vadd.f32 %v674, %v745
      %v810 = vadd.f32 %v675, %v746
      %v811 = vadd.f32 %v676, %v747
      %v812 = vadd.f32 %v677, %v748
      %v813 = vadd.f32 %v678, %v749
      %v814 = vadd.f32 %v679, %v750
      %v815 = vadd.f32 %v680, %v751
      %v816 = vadd.f32 %v681, %v752
      %v817 = vadd.f32 %v682, %v753
      %v818 = vadd.f32 %v683, %v754
      %v819 = vadd.f32 %v684, %v755
      %v820 = vadd.f32 %v685, %v756
      %v821 = vadd.f32 %v686, %v757
      %v822 = vadd.f32 %v687, %v758
      %v823 = vadd.f32 %v688, %v759
      %v824 = vadd.f32 %v689, %v760
      %v825 = vadd.f32 %v690, %v761
      %v826 = vadd.f32 %v691, %v762
      %v827 = vadd.f32 %v692, %v763
      %v828 = vadd.f32 %v693, %v764
      %v829 = vadd.f32 %v694, %v765
      %v830 = vadd.f32 %v695, %v766
      %v831 = vadd.f32 %v696, %v767
      %v832 = vadd.f32 %v697, %v768
      %v833 = vadd.f32 %v698, %v769
      %v834 = vadd.f32 %v699, %v770
      %v835 = vadd.f32 %v700, %v771
      %v836 = vadd.f32 %v701, %v772
      %v837 = vadd.f32 %v702, %v773
      %v838 = vadd.f32 %v703, %v774
      %v839 = vadd.f32 %v704, %v775
      %v840 = vadd.f32 %v705, %v776
      %v841 = vadd.f32 %v706, %v777
      %v842 = vadd.f32 %v707, %v778
      %v843 = vadd.f32 %v708, %v779
      %v844 = vadd.f32 %v709, %v780
      %v845 = vadd.f32 %v710, %v781
      %v846 = vadd.f32 %v711, %v782
      %v847 = vadd.f32 %v712, %v783
      %v848 = vadd.f32 %v713, %v784
      %v849 = vadd.f32 %v714, %v785
      %v850 = vadd.f32 %v715, %v786
      %v851 = vadd.f32 %v716, %v787
      %v852 = vadd.f32 %v717, %v788
      %v853 = vadd.f32 %v718, %v789
      %v854 = vadd.f32 %v719, %v790
      %v855 = vadd.f32 %v720, %v791
      %v856 = vadd.f32 %v721, %v792
      %v857 = vadd.f32 %v722, %v793
      %v858 = vadd.f32 %v723, %v794
      %v859 = vadd.f32 %v724, %v795
      %v860 = vadd.f32 %v725, %v796
      %v861 = vadd.f32 %v726, %v797
      %v862 = vadd.f32 %v727, %v798
      %v863 = vadd.f32 %v728, %v799
      %v864 = vadd.f32 %v729, %v800
      %v865 = vadd.f32 %v730, %v801
      %v866 = vadd.f32 %v731, %v802
      %v867 = vadd.f32 %v732, %v803
      %v868 = vadd.f32 %v733, %v804
      %v869 = vadd.f32 %v734, %v805
      %v870 = vadd.f32 %v735, %v806
      %v871 = vadd.f32 %v736, %v807
      %v873 = vperm.slane %v298, 1
      %v874 = vperm.slane %v298, 3
      %v877 = vperm.slane %v873, 1
      %v878 = vperm.slane %v874, 1
      %v879 = vmul.f32 %v473, %v877
      %v880 = vmul.f32 %v474, %v878
      %v881 = vmul.f32 %v475, %v877
      %v882 = vmul.f32 %v476, %v878
      %v883 = vmul.f32 %v477, %v877
      %v884 = vmul.f32 %v478, %v878
      %v885 = vmul.f32 %v479, %v877
      %v886 = vmul.f32 %v480, %v878
      %v887 = vmul.f32 %v481, %v877
      %v888 = vmul.f32 %v482, %v878
      %v889 = vmul.f32 %v483, %v877
      %v890 = vmul.f32 %v484, %v878
      %v891 = vmul.f32 %v485, %v877
      %v892 = vmul.f32 %v486, %v878
      %v893 = vmul.f32 %v487, %v877
      %v894 = vmul.f32 %v488, %v878
      %v895 = vmul.f32 %v489, %v877
      %v896 = vmul.f32 %v490, %v878
      %v897 = vmul.f32 %v491, %v877
      %v898 = vmul.f32 %v492, %v878
      %v899 = vmul.f32 %v493, %v877
      %v900 = vmul.f32 %v494, %v878
      %v901 = vmul.f32 %v495, %v877
      %v902 = vmul.f32 %v496, %v878
      %v903 = vmul.f32 %v497, %v877
      %v904 = vmul.f32 %v498, %v878
      %v905 = vmul.f32 %v499, %v877
      %v906 = vmul.f32 %v500, %v878
      %v907 = vmul.f32 %v501, %v877
      %v908 = vmul.f32 %v502, %v878
      %v909 = vmul.f32 %v503, %v877
      %v910 = vmul.f32 %v504, %v878
      %v911 = vmul.f32 %v505, %v877
      %v912 = vmul.f32 %v506, %v878
      %v913 = vmul.f32 %v507, %v877
      %v914 = vmul.f32 %v508, %v878
      %v915 = vmul.f32 %v509, %v877
      %v916 = vmul.f32 %v510, %v878
      %v917 = vmul.f32 %v511, %v877
      %v918 = vmul.f32 %v512, %v878
      %v919 = vmul.f32 %v513, %v877
      %v920 = vmul.f32 %v514, %v878
      %v921 = vmul.f32 %v515, %v877
      %v922 = vmul.f32 %v516, %v878
      %v923 = vmul.f32 %v517, %v877
      %v924 = vmul.f32 %v518, %v878
      %v925 = vmul.f32 %v519, %v877
      %v926 = vmul.f32 %v520, %v878
      %v927 = vmul.f32 %v521, %v877
      %v928 = vmul.f32 %v522, %v878
      %v929 = vmul.f32 %v523, %v877
      %v930 = vmul.f32 %v524, %v878
      %v931 = vmul.f32 %v525, %v877
      %v932 = vmul.f32 %v526, %v878
      %v933 = vmul.f32 %v527, %v877
      %v934 = vmul.f32 %v528, %v878
      %v935 = vmul.f32 %v529, %v877
      %v936 = vmul.f32 %v530, %v878
      %v937 = vmul.f32 %v531, %v877
      %v938 = vmul.f32 %v532, %v878
      %v939 = vmul.f32 %v533, %v877
      %v940 = vmul.f32 %v534, %v878
      %v941 = vmul.f32 %v535, %v877
      %v942 = vmul.f32 %v536, %v878
      %v944 = vperm.slane %v301, 1
      %v945 = vperm.slane %v301, 3
      %v948 = vperm.slane %v944, 1
      %v949 = vperm.slane %v945, 1
      %v950 = vmul.f32 %v664, %v948
      %v951 = vmul.f32 %v665, %v949
      %v952 = vmul.f32 %v662, %v948
      %v953 = vmul.f32 %v663, %v949
      %v954 = vmul.f32 %v660, %v948
      %v955 = vmul.f32 %v661, %v949
      %v956 = vmul.f32 %v658, %v948
      %v957 = vmul.f32 %v659, %v949
      %v958 = vmul.f32 %v656, %v948
      %v959 = vmul.f32 %v657, %v949
      %v960 = vmul.f32 %v654, %v948
      %v961 = vmul.f32 %v655, %v949
      %v962 = vmul.f32 %v652, %v948
      %v963 = vmul.f32 %v653, %v949
      %v964 = vmul.f32 %v650, %v948
      %v965 = vmul.f32 %v651, %v949
      %v966 = vmul.f32 %v648, %v948
      %v967 = vmul.f32 %v649, %v949
      %v968 = vmul.f32 %v646, %v948
      %v969 = vmul.f32 %v647, %v949
      %v970 = vmul.f32 %v644, %v948
      %v971 = vmul.f32 %v645, %v949
      %v972 = vmul.f32 %v642, %v948
      %v973 = vmul.f32 %v643, %v949
      %v974 = vmul.f32 %v640, %v948
      %v975 = vmul.f32 %v641, %v949
      %v976 = vmul.f32 %v638, %v948
      %v977 = vmul.f32 %v639, %v949
      %v978 = vmul.f32 %v636, %v948
      %v979 = vmul.f32 %v637, %v949
      %v980 = vmul.f32 %v634, %v948
      %v981 = vmul.f32 %v635, %v949
      %v982 = vmul.f32 %v632, %v948
      %v983 = vmul.f32 %v633, %v949
      %v984 = vmul.f32 %v630, %v948
      %v985 = vmul.f32 %v631, %v949
      %v986 = vmul.f32 %v628, %v948
      %v987 = vmul.f32 %v629, %v949
      %v988 = vmul.f32 %v626, %v948
      %v989 = vmul.f32 %v627, %v949
      %v990 = vmul.f32 %v624, %v948
      %v991 = vmul.f32 %v625, %v949
      %v992 = vmul.f32 %v622, %v948
      %v993 = vmul.f32 %v623, %v949
      %v994 = vmul.f32 %v620, %v948
      %v995 = vmul.f32 %v621, %v949
      %v996 = vmul.f32 %v618, %v948
      %v997 = vmul.f32 %v619, %v949
      %v998 = vmul.f32 %v616, %v948
      %v999 = vmul.f32 %v617, %v949
      %v1000 = vmul.f32 %v614, %v948
      %v1001 = vmul.f32 %v615, %v949
      %v1002 = vmul.f32 %v612, %v948
      %v1003 = vmul.f32 %v613, %v949
      %v1004 = vmul.f32 %v610, %v948
      %v1005 = vmul.f32 %v611, %v949
      %v1006 = vmul.f32 %v608, %v948
      %v1007 = vmul.f32 %v609, %v949
      %v1008 = vmul.f32 %v606, %v948
      %v1009 = vmul.f32 %v607, %v949
      %v1010 = vmul.f32 %v604, %v948
      %v1011 = vmul.f32 %v605, %v949
      %v1012 = vmul.f32 %v602, %v948
      %v1013 = vmul.f32 %v603, %v949
      %v1014 = vadd.f32 %v879, %v950
      %v1015 = vadd.f32 %v880, %v951
      %v1016 = vadd.f32 %v881, %v952
      %v1017 = vadd.f32 %v882, %v953
      %v1018 = vadd.f32 %v883, %v954
      %v1019 = vadd.f32 %v884, %v955
      %v1020 = vadd.f32 %v885, %v956
      %v1021 = vadd.f32 %v886, %v957
      %v1022 = vadd.f32 %v887, %v958
      %v1023 = vadd.f32 %v888, %v959
      %v1024 = vadd.f32 %v889, %v960
      %v1025 = vadd.f32 %v890, %v961
      %v1026 = vadd.f32 %v891, %v962
      %v1027 = vadd.f32 %v892, %v963
      %v1028 = vadd.f32 %v893, %v964
      %v1029 = vadd.f32 %v894, %v965
      %v1030 = vadd.f32 %v895, %v966
      %v1031 = vadd.f32 %v896, %v967
      %v1032 = vadd.f32 %v897, %v968
      %v1033 = vadd.f32 %v898, %v969
      %v1034 = vadd.f32 %v899, %v970
      %v1035 = vadd.f32 %v900, %v971
      %v1036 = vadd.f32 %v901, %v972
      %v1037 = vadd.f32 %v902, %v973
      %v1038 = vadd.f32 %v903, %v974
      %v1039 = vadd.f32 %v904, %v975
      %v1040 = vadd.f32 %v905, %v976
      %v1041 = vadd.f32 %v906, %v977
      %v1042 = vadd.f32 %v907, %v978
      %v1043 = vadd.f32 %v908, %v979
      %v1044 = vadd.f32 %v909, %v980
      %v1045 = vadd.f32 %v910, %v981
      %v1046 = vadd.f32 %v911, %v982
      %v1047 = vadd.f32 %v912, %v983
      %v1048 = vadd.f32 %v913, %v984
      %v1049 = vadd.f32 %v914, %v985
      %v1050 = vadd.f32 %v915, %v986
      %v1051 = vadd.f32 %v916, %v987
      %v1052 = vadd.f32 %v917, %v988
      %v1053 = vadd.f32 %v918, %v989
      %v1054 = vadd.f32 %v919, %v990
      %v1055 = vadd.f32 %v920, %v991
      %v1056 = vadd.f32 %v921, %v992
      %v1057 = vadd.f32 %v922, %v993
      %v1058 = vadd.f32 %v923, %v994
      %v1059 = vadd.f32 %v924, %v995
      %v1060 = vadd.f32 %v925, %v996
      %v1061 = vadd.f32 %v926, %v997
      %v1062 = vadd.f32 %v927, %v998
      %v1063 = vadd.f32 %v928, %v999
      %v1064 = vadd.f32 %v929, %v1000
      %v1065 = vadd.f32 %v930, %v1001
      %v1066 = vadd.f32 %v931, %v1002
      %v1067 = vadd.f32 %v932, %v1003
      %v1068 = vadd.f32 %v933, %v1004
      %v1069 = vadd.f32 %v934, %v1005
      %v1070 = vadd.f32 %v935, %v1006
      %v1071 = vadd.f32 %v936, %v1007
      %v1072 = vadd.f32 %v937, %v1008
      %v1073 = vadd.f32 %v938, %v1009
      %v1074 = vadd.f32 %v939, %v1010
      %v1075 = vadd.f32 %v940, %v1011
      %v1076 = vadd.f32 %v941, %v1012
      %v1077 = vadd.f32 %v942, %v1013
      %v1078 = vadd.f32 %v808, %v1074
      %v1079 = vadd.f32 %v809, %v1075
      %v1080 = vadd.f32 %v810, %v1076
      %v1081 = vadd.f32 %v811, %v1077
      %v1082 = vadd.f32 %v812, %v1014
      %v1083 = vadd.f32 %v813, %v1015
      %v1084 = vadd.f32 %v814, %v1016
      %v1085 = vadd.f32 %v815, %v1017
      %v1086 = vadd.f32 %v816, %v1018
      %v1087 = vadd.f32 %v817, %v1019
      %v1088 = vadd.f32 %v818, %v1020
      %v1089 = vadd.f32 %v819, %v1021
      %v1090 = vadd.f32 %v820, %v1022
      %v1091 = vadd.f32 %v821, %v1023
      %v1092 = vadd.f32 %v822, %v1024
      %v1093 = vadd.f32 %v823, %v1025
      %v1094 = vadd.f32 %v824, %v1026
      %v1095 = vadd.f32 %v825, %v1027
      %v1096 = vadd.f32 %v826, %v1028
      %v1097 = vadd.f32 %v827, %v1029
      %v1098 = vadd.f32 %v828, %v1030
      %v1099 = vadd.f32 %v829, %v1031
      %v1100 = vadd.f32 %v830, %v1032
      %v1101 = vadd.f32 %v831, %v1033
      %v1102 = vadd.f32 %v832, %v1034
      %v1103 = vadd.f32 %v833, %v1035
      %v1104 = vadd.f32 %v834, %v1036
      %v1105 = vadd.f32 %v835, %v1037
      %v1106 = vadd.f32 %v836, %v1038
      %v1107 = vadd.f32 %v837, %v1039
      %v1108 = vadd.f32 %v838, %v1040
      %v1109 = vadd.f32 %v839, %v1041
      %v1110 = vadd.f32 %v840, %v1042
      %v1111 = vadd.f32 %v841, %v1043
      %v1112 = vadd.f32 %v842, %v1044
      %v1113 = vadd.f32 %v843, %v1045
      %v1114 = vadd.f32 %v844, %v1046
      %v1115 = vadd.f32 %v845, %v1047
      %v1116 = vadd.f32 %v846, %v1048
      %v1117 = vadd.f32 %v847, %v1049
      %v1118 = vadd.f32 %v848, %v1050
      %v1119 = vadd.f32 %v849, %v1051
      %v1120 = vadd.f32 %v850, %v1052
      %v1121 = vadd.f32 %v851, %v1053
      %v1122 = vadd.f32 %v852, %v1054
      %v1123 = vadd.f32 %v853, %v1055
      %v1124 = vadd.f32 %v854, %v1056
      %v1125 = vadd.f32 %v855, %v1057
      %v1126 = vadd.f32 %v856, %v1058
      %v1127 = vadd.f32 %v857, %v1059
      %v1128 = vadd.f32 %v858, %v1060
      %v1129 = vadd.f32 %v859, %v1061
      %v1130 = vadd.f32 %v860, %v1062
      %v1131 = vadd.f32 %v861, %v1063
      %v1132 = vadd.f32 %v862, %v1064
      %v1133 = vadd.f32 %v863, %v1065
      %v1134 = vadd.f32 %v864, %v1066
      %v1135 = vadd.f32 %v865, %v1067
      %v1136 = vadd.f32 %v866, %v1068
      %v1137 = vadd.f32 %v867, %v1069
      %v1138 = vadd.f32 %v868, %v1070
      %v1139 = vadd.f32 %v869, %v1071
      %v1140 = vadd.f32 %v870, %v1072
      %v1141 = vadd.f32 %v871, %v1073
      %v1142 = vld [vmem:[%s225] sm:$0xff]
      %1144 = vst [vmem:[#allocation1] ss:$2 sm:$0xff] %v1142
      %v1145 = vld.sshfl [vmem:[#allocation1] sm:$0xff pattern:$0x75316420]
      %v1146 = vld.sshfl [vmem:[#allocation1 + $0x8] sm:$0xff pattern:$0x75316420]
      %v1149 = vand.u32 %v1108, 4294901760
      %1150 = vmatpush.msra.mxu0 %v1149
      %v1151 = vand.u32 %v1106, 4294901760
      %1152 = vmatpush.msra.mxu0 %v1151
      %v1153 = vand.u32 %v1104, 4294901760
      %1154 = vmatpush.msra.mxu0 %v1153
      %v1155 = vand.u32 %v1102, 4294901760
      %1156 = vmatpush.msra.mxu0 %v1155
      %v1157 = vand.u32 %v1100, 4294901760
      %1158 = vmatpush.msra.mxu0 %v1157
      %v1159 = vand.u32 %v1098, 4294901760
      %1160 = vmatpush.msra.mxu0 %v1159
      %v1161 = vand.u32 %v1096, 4294901760
      %1162 = vmatpush.msra.mxu0 %v1161
      %v1163 = vand.u32 %v1094, 4294901760
      %1164 = vmatpush.msra.mxu0 %v1163
      %v1165 = vand.u32 %v1092, 4294901760
      %1166 = vmatpush.msra.mxu0 %v1165
      %v1167 = vand.u32 %v1090, 4294901760
      %1168 = vmatpush.msra.mxu0 %v1167
      %v1169 = vand.u32 %v1088, 4294901760
      %1170 = vmatpush.msra.mxu0 %v1169
      %v1171 = vand.u32 %v1086, 4294901760
      %1172 = vmatpush.msra.mxu0 %v1171
      %v1173 = vand.u32 %v1084, 4294901760
      %1174 = vmatpush.msra.mxu0 %v1173
      %v1175 = vand.u32 %v1082, 4294901760
      %1176 = vmatpush.msra.mxu0 %v1175
      %v1177 = vand.u32 %v1080, 4294901760
      %1178 = vmatpush.msra.mxu0 %v1177
      %v1179 = vand.u32 %v1078, 4294901760
      %1180 = vmatpush.msra.mxu0 %v1179
      %v1181 = vand.u32 %v1145, 4294901760
      %v1182 = vsub.f32 %v1145, %v1181
      %v1183 = vand.u32 %v1182, 4294901760
      %v1184 = vsub.f32 %v1182, %v1183
      %v1185 = vand.u32 %v1184, 4294901760
      %1186 = vmatmul.f32.gmra.mxu0 %v1185
      %v1187 = vpop.f32.mrf.mxu0
      %v1188 = vadd.f32 0.0, %v1187
      %1189 = vdwg.mxu0
      %v1190 = vand.u32 %v1108, 4294901760
      %v1191 = vsub.f32 %v1108, %v1190
      %v1192 = vand.u32 %v1191, 4294901760
      %v1193 = vsub.f32 %v1191, %v1192
      %v1194 = vand.u32 %v1193, 4294901760
      %1195 = vmatpush.msra.mxu0 %v1194
      %v1196 = vand.u32 %v1106, 4294901760
      %v1197 = vsub.f32 %v1106, %v1196
      %v1198 = vand.u32 %v1197, 4294901760
      %v1199 = vsub.f32 %v1197, %v1198
      %v1200 = vand.u32 %v1199, 4294901760
      %1201 = vmatpush.msra.mxu0 %v1200
      %v1202 = vand.u32 %v1104, 4294901760
      %v1203 = vsub.f32 %v1104, %v1202
      %v1204 = vand.u32 %v1203, 4294901760
      %v1205 = vsub.f32 %v1203, %v1204
      %v1206 = vand.u32 %v1205, 4294901760
      %1207 = vmatpush.msra.mxu0 %v1206
      %v1208 = vand.u32 %v1102, 4294901760
      %v1209 = vsub.f32 %v1102, %v1208
      %v1210 = vand.u32 %v1209, 4294901760
      %v1211 = vsub.f32 %v1209, %v1210
      %v1212 = vand.u32 %v1211, 4294901760
      %1213 = vmatpush.msra.mxu0 %v1212
      %v1214 = vand.u32 %v1100, 4294901760
      %v1215 = vsub.f32 %v1100, %v1214
      %v1216 = vand.u32 %v1215, 4294901760
      %v1217 = vsub.f32 %v1215, %v1216
      %v1218 = vand.u32 %v1217, 4294901760
      %1219 = vmatpush.msra.mxu0 %v1218
      %v1220 = vand.u32 %v1098, 4294901760
      %v1221 = vsub.f32 %v1098, %v1220
      %v1222 = vand.u32 %v1221, 4294901760
      %v1223 = vsub.f32 %v1221, %v1222
      %v1224 = vand.u32 %v1223, 4294901760
      %1225 = vmatpush.msra.mxu0 %v1224
      %v1226 = vand.u32 %v1096, 4294901760
      %v1227 = vsub.f32 %v1096, %v1226
      %v1228 = vand.u32 %v1227, 4294901760
      %v1229 = vsub.f32 %v1227, %v1228
      %v1230 = vand.u32 %v1229, 4294901760
      %1231 = vmatpush.msra.mxu0 %v1230
      %v1232 = vand.u32 %v1094, 4294901760
      %v1233 = vsub.f32 %v1094, %v1232
      %v1234 = vand.u32 %v1233, 4294901760
      %v1235 = vsub.f32 %v1233, %v1234
      %v1236 = vand.u32 %v1235, 4294901760
      %1237 = vmatpush.msra.mxu0 %v1236
      %v1238 = vand.u32 %v1092, 4294901760
      %v1239 = vsub.f32 %v1092, %v1238
      %v1240 = vand.u32 %v1239, 4294901760
      %v1241 = vsub.f32 %v1239, %v1240
      %v1242 = vand.u32 %v1241, 4294901760
      %1243 = vmatpush.msra.mxu0 %v1242
      %v1244 = vand.u32 %v1090, 4294901760
      %v1245 = vsub.f32 %v1090, %v1244
      %v1246 = vand.u32 %v1245, 4294901760
      %v1247 = vsub.f32 %v1245, %v1246
      %v1248 = vand.u32 %v1247, 4294901760
      %1249 = vmatpush.msra.mxu0 %v1248
      %v1250 = vand.u32 %v1088, 4294901760
      %v1251 = vsub.f32 %v1088, %v1250
      %v1252 = vand.u32 %v1251, 4294901760
      %v1253 = vsub.f32 %v1251, %v1252
      %v1254 = vand.u32 %v1253, 4294901760
      %1255 = vmatpush.msra.mxu0 %v1254
      %v1256 = vand.u32 %v1086, 4294901760
      %v1257 = vsub.f32 %v1086, %v1256
      %v1258 = vand.u32 %v1257, 4294901760
      %v1259 = vsub.f32 %v1257, %v1258
      %v1260 = vand.u32 %v1259, 4294901760
      %1261 = vmatpush.msra.mxu0 %v1260
      %v1262 = vand.u32 %v1084, 4294901760
      %v1263 = vsub.f32 %v1084, %v1262
      %v1264 = vand.u32 %v1263, 4294901760
      %v1265 = vsub.f32 %v1263, %v1264
      %v1266 = vand.u32 %v1265, 4294901760
      %1267 = vmatpush.msra.mxu0 %v1266
      %v1268 = vand.u32 %v1082, 4294901760
      %v1269 = vsub.f32 %v1082, %v1268
      %v1270 = vand.u32 %v1269, 4294901760
      %v1271 = vsub.f32 %v1269, %v1270
      %v1272 = vand.u32 %v1271, 4294901760
      %1273 = vmatpush.msra.mxu0 %v1272
      %v1274 = vand.u32 %v1080, 4294901760
      %v1275 = vsub.f32 %v1080, %v1274
      %v1276 = vand.u32 %v1275, 4294901760
      %v1277 = vsub.f32 %v1275, %v1276
      %v1278 = vand.u32 %v1277, 4294901760
      %1279 = vmatpush.msra.mxu0 %v1278
      %v1280 = vand.u32 %v1078, 4294901760
      %v1281 = vsub.f32 %v1078, %v1280
      %v1282 = vand.u32 %v1281, 4294901760
      %v1283 = vsub.f32 %v1281, %v1282
      %v1284 = vand.u32 %v1283, 4294901760
      %1285 = vmatpush.msra.mxu0 %v1284
      %v1286 = vand.u32 %v1145, 4294901760
      %1287 = vmatmul.f32.gmra.mxu0 %v1286
      %v1288 = vpop.f32.mrf.mxu0
      %v1289 = vadd.f32 %v1188, %v1288
      %1290 = vdwg.mxu0
      %v1291 = vand.u32 %v1108, 4294901760
      %v1292 = vsub.f32 %v1108, %v1291
      %1293 = vmatpush.msra.mxu0 %v1292
      %v1294 = vand.u32 %v1106, 4294901760
      %v1295 = vsub.f32 %v1106, %v1294
      %1296 = vmatpush.msra.mxu0 %v1295
      %v1297 = vand.u32 %v1104, 4294901760
      %v1298 = vsub.f32 %v1104, %v1297
      %1299 = vmatpush.msra.mxu0 %v1298
      %v1300 = vand.u32 %v1102, 4294901760
      %v1301 = vsub.f32 %v1102, %v1300
      %1302 = vmatpush.msra.mxu0 %v1301
      %v1303 = vand.u32 %v1100, 4294901760
      %v1304 = vsub.f32 %v1100, %v1303
      %1305 = vmatpush.msra.mxu0 %v1304
      %v1306 = vand.u32 %v1098, 4294901760
      %v1307 = vsub.f32 %v1098, %v1306
      %1308 = vmatpush.msra.mxu0 %v1307
      %v1309 = vand.u32 %v1096, 4294901760
      %v1310 = vsub.f32 %v1096, %v1309
      %1311 = vmatpush.msra.mxu0 %v1310
      %v1312 = vand.u32 %v1094, 4294901760
      %v1313 = vsub.f32 %v1094, %v1312
      %1314 = vmatpush.msra.mxu0 %v1313
      %v1315 = vand.u32 %v1092, 4294901760
      %v1316 = vsub.f32 %v1092, %v1315
      %1317 = vmatpush.msra.mxu0 %v1316
      %v1318 = vand.u32 %v1090, 4294901760
      %v1319 = vsub.f32 %v1090, %v1318
      %1320 = vmatpush.msra.mxu0 %v1319
      %v1321 = vand.u32 %v1088, 4294901760
      %v1322 = vsub.f32 %v1088, %v1321
      %1323 = vmatpush.msra.mxu0 %v1322
      %v1324 = vand.u32 %v1086, 4294901760
      %v1325 = vsub.f32 %v1086, %v1324
      %1326 = vmatpush.msra.mxu0 %v1325
      %v1327 = vand.u32 %v1084, 4294901760
      %v1328 = vsub.f32 %v1084, %v1327
      %1329 = vmatpush.msra.mxu0 %v1328
      %v1330 = vand.u32 %v1082, 4294901760
      %v1331 = vsub.f32 %v1082, %v1330
      %1332 = vmatpush.msra.mxu0 %v1331
      %v1333 = vand.u32 %v1080, 4294901760
      %v1334 = vsub.f32 %v1080, %v1333
      %1335 = vmatpush.msra.mxu0 %v1334
      %v1336 = vand.u32 %v1078, 4294901760
      %v1337 = vsub.f32 %v1078, %v1336
      %1338 = vmatpush.msra.mxu0 %v1337
      %v1339 = vand.u32 %v1145, 4294901760
      %v1340 = vsub.f32 %v1145, %v1339
      %1341 = vmatmul.f32.gmra.mxu0 %v1340
      %v1342 = vpop.f32.mrf.mxu0
      %v1343 = vadd.f32 %v1289, %v1342
      %1344 = vdwg.mxu0
      %v1345 = vand.u32 %v1108, 4294901760
      %1346 = vmatpush.msra.mxu0 %v1345
      %v1347 = vand.u32 %v1106, 4294901760
      %1348 = vmatpush.msra.mxu0 %v1347
      %v1349 = vand.u32 %v1104, 4294901760
      %1350 = vmatpush.msra.mxu0 %v1349
      %v1351 = vand.u32 %v1102, 4294901760
      %1352 = vmatpush.msra.mxu0 %v1351
      %v1353 = vand.u32 %v1100, 4294901760
      %1354 = vmatpush.msra.mxu0 %v1353
      %v1355 = vand.u32 %v1098, 4294901760
      %1356 = vmatpush.msra.mxu0 %v1355
      %v1357 = vand.u32 %v1096, 4294901760
      %1358 = vmatpush.msra.mxu0 %v1357
      %v1359 = vand.u32 %v1094, 4294901760
      %1360 = vmatpush.msra.mxu0 %v1359
      %v1361 = vand.u32 %v1092, 4294901760
      %1362 = vmatpush.msra.mxu0 %v1361
      %v1363 = vand.u32 %v1090, 4294901760
      %1364 = vmatpush.msra.mxu0 %v1363
      %v1365 = vand.u32 %v1088, 4294901760
      %1366 = vmatpush.msra.mxu0 %v1365
      %v1367 = vand.u32 %v1086, 4294901760
      %1368 = vmatpush.msra.mxu0 %v1367
      %v1369 = vand.u32 %v1084, 4294901760
      %1370 = vmatpush.msra.mxu0 %v1369
      %v1371 = vand.u32 %v1082, 4294901760
      %1372 = vmatpush.msra.mxu0 %v1371
      %v1373 = vand.u32 %v1080, 4294901760
      %1374 = vmatpush.msra.mxu0 %v1373
      %v1375 = vand.u32 %v1078, 4294901760
      %1376 = vmatpush.msra.mxu0 %v1375
      %v1377 = vand.u32 %v1145, 4294901760
      %v1378 = vsub.f32 %v1145, %v1377
      %v1379 = vand.u32 %v1378, 4294901760
      %1380 = vmatmul.f32.gmra.mxu0 %v1379
      %v1381 = vpop.f32.mrf.mxu0
      %v1382 = vadd.f32 %v1343, %v1381
      %1383 = vdwg.mxu0
      %v1384 = vand.u32 %v1108, 4294901760
      %v1385 = vsub.f32 %v1108, %v1384
      %v1386 = vand.u32 %v1385, 4294901760
      %1387 = vmatpush.msra.mxu0 %v1386
      %v1388 = vand.u32 %v1106, 4294901760
      %v1389 = vsub.f32 %v1106, %v1388
      %v1390 = vand.u32 %v1389, 4294901760
      %1391 = vmatpush.msra.mxu0 %v1390
      %v1392 = vand.u32 %v1104, 4294901760
      %v1393 = vsub.f32 %v1104, %v1392
      %v1394 = vand.u32 %v1393, 4294901760
      %1395 = vmatpush.msra.mxu0 %v1394
      %v1396 = vand.u32 %v1102, 4294901760
      %v1397 = vsub.f32 %v1102, %v1396
      %v1398 = vand.u32 %v1397, 4294901760
      %1399 = vmatpush.msra.mxu0 %v1398
      %v1400 = vand.u32 %v1100, 4294901760
      %v1401 = vsub.f32 %v1100, %v1400
      %v1402 = vand.u32 %v1401, 4294901760
      %1403 = vmatpush.msra.mxu0 %v1402
      %v1404 = vand.u32 %v1098, 4294901760
      %v1405 = vsub.f32 %v1098, %v1404
      %v1406 = vand.u32 %v1405, 4294901760
      %1407 = vmatpush.msra.mxu0 %v1406
      %v1408 = vand.u32 %v1096, 4294901760
      %v1409 = vsub.f32 %v1096, %v1408
      %v1410 = vand.u32 %v1409, 4294901760
      %1411 = vmatpush.msra.mxu0 %v1410
      %v1412 = vand.u32 %v1094, 4294901760
      %v1413 = vsub.f32 %v1094, %v1412
      %v1414 = vand.u32 %v1413, 4294901760
      %1415 = vmatpush.msra.mxu0 %v1414
      %v1416 = vand.u32 %v1092, 4294901760
      %v1417 = vsub.f32 %v1092, %v1416
      %v1418 = vand.u32 %v1417, 4294901760
      %1419 = vmatpush.msra.mxu0 %v1418
      %v1420 = vand.u32 %v1090, 4294901760
      %v1421 = vsub.f32 %v1090, %v1420
      %v1422 = vand.u32 %v1421, 4294901760
      %1423 = vmatpush.msra.mxu0 %v1422
      %v1424 = vand.u32 %v1088, 4294901760
      %v1425 = vsub.f32 %v1088, %v1424
      %v1426 = vand.u32 %v1425, 4294901760
      %1427 = vmatpush.msra.mxu0 %v1426
      %v1428 = vand.u32 %v1086, 4294901760
      %v1429 = vsub.f32 %v1086, %v1428
      %v1430 = vand.u32 %v1429, 4294901760
      %1431 = vmatpush.msra.mxu0 %v1430
      %v1432 = vand.u32 %v1084, 4294901760
      %v1433 = vsub.f32 %v1084, %v1432
      %v1434 = vand.u32 %v1433, 4294901760
      %1435 = vmatpush.msra.mxu0 %v1434
      %v1436 = vand.u32 %v1082, 4294901760
      %v1437 = vsub.f32 %v1082, %v1436
      %v1438 = vand.u32 %v1437, 4294901760
      %1439 = vmatpush.msra.mxu0 %v1438
      %v1440 = vand.u32 %v1080, 4294901760
      %v1441 = vsub.f32 %v1080, %v1440
      %v1442 = vand.u32 %v1441, 4294901760
      %1443 = vmatpush.msra.mxu0 %v1442
      %v1444 = vand.u32 %v1078, 4294901760
      %v1445 = vsub.f32 %v1078, %v1444
      %v1446 = vand.u32 %v1445, 4294901760
      %1447 = vmatpush.msra.mxu0 %v1446
      %v1448 = vand.u32 %v1145, 4294901760
      %1449 = vmatmul.f32.gmra.mxu0 %v1448
      %v1450 = vpop.f32.mrf.mxu0
      %v1451 = vadd.f32 %v1382, %v1450
      %1452 = vdwg.mxu0
      %v1453 = vand.u32 %v1108, 4294901760
      %1454 = vmatpush.msra.mxu0 %v1453
      %v1455 = vand.u32 %v1106, 4294901760
      %1456 = vmatpush.msra.mxu0 %v1455
      %v1457 = vand.u32 %v1104, 4294901760
      %1458 = vmatpush.msra.mxu0 %v1457
      %v1459 = vand.u32 %v1102, 4294901760
      %1460 = vmatpush.msra.mxu0 %v1459
      %v1461 = vand.u32 %v1100, 4294901760
      %1462 = vmatpush.msra.mxu0 %v1461
      %v1463 = vand.u32 %v1098, 4294901760
      %1464 = vmatpush.msra.mxu0 %v1463
      %v1465 = vand.u32 %v1096, 4294901760
      %1466 = vmatpush.msra.mxu0 %v1465
      %v1467 = vand.u32 %v1094, 4294901760
      %1468 = vmatpush.msra.mxu0 %v1467
      %v1469 = vand.u32 %v1092, 4294901760
      %1470 = vmatpush.msra.mxu0 %v1469
      %v1471 = vand.u32 %v1090, 4294901760
      %1472 = vmatpush.msra.mxu0 %v1471
      %v1473 = vand.u32 %v1088, 4294901760
      %1474 = vmatpush.msra.mxu0 %v1473
      %v1475 = vand.u32 %v1086, 4294901760
      %1476 = vmatpush.msra.mxu0 %v1475
      %v1477 = vand.u32 %v1084, 4294901760
      %1478 = vmatpush.msra.mxu0 %v1477
      %v1479 = vand.u32 %v1082, 4294901760
      %1480 = vmatpush.msra.mxu0 %v1479
      %v1481 = vand.u32 %v1080, 4294901760
      %1482 = vmatpush.msra.mxu0 %v1481
      %v1483 = vand.u32 %v1078, 4294901760
      %1484 = vmatpush.msra.mxu0 %v1483
      %v1485 = vand.u32 %v1145, 4294901760
      %1486 = vmatmul.f32.gmra.mxu0 %v1485
      %v1487 = vpop.f32.mrf.mxu0
      %v1488 = vadd.f32 %v1451, %v1487
      %1489 = vdwg.mxu0
      %v1490 = vand.u32 %v1140, 4294901760
      %1491 = vmatpush.msra.mxu0 %v1490
      %v1492 = vand.u32 %v1138, 4294901760
      %1493 = vmatpush.msra.mxu0 %v1492
      %v1494 = vand.u32 %v1136, 4294901760
      %1495 = vmatpush.msra.mxu0 %v1494
      %v1496 = vand.u32 %v1134, 4294901760
      %1497 = vmatpush.msra.mxu0 %v1496
      %v1498 = vand.u32 %v1132, 4294901760
      %1499 = vmatpush.msra.mxu0 %v1498
      %v1500 = vand.u32 %v1130, 4294901760
      %1501 = vmatpush.msra.mxu0 %v1500
      %v1502 = vand.u32 %v1128, 4294901760
      %1503 = vmatpush.msra.mxu0 %v1502
      %v1504 = vand.u32 %v1126, 4294901760
      %1505 = vmatpush.msra.mxu0 %v1504
      %v1506 = vand.u32 %v1124, 4294901760
      %1507 = vmatpush.msra.mxu0 %v1506
      %v1508 = vand.u32 %v1122, 4294901760
      %1509 = vmatpush.msra.mxu0 %v1508
      %v1510 = vand.u32 %v1120, 4294901760
      %1511 = vmatpush.msra.mxu0 %v1510
      %v1512 = vand.u32 %v1118, 4294901760
      %1513 = vmatpush.msra.mxu0 %v1512
      %v1514 = vand.u32 %v1116, 4294901760
      %1515 = vmatpush.msra.mxu0 %v1514
      %v1516 = vand.u32 %v1114, 4294901760
      %1517 = vmatpush.msra.mxu0 %v1516
      %v1518 = vand.u32 %v1112, 4294901760
      %1519 = vmatpush.msra.mxu0 %v1518
      %v1520 = vand.u32 %v1110, 4294901760
      %1521 = vmatpush.msra.mxu0 %v1520
      %v1522 = vand.u32 %v1146, 4294901760
      %v1523 = vsub.f32 %v1146, %v1522
      %v1524 = vand.u32 %v1523, 4294901760
      %v1525 = vsub.f32 %v1523, %v1524
      %v1526 = vand.u32 %v1525, 4294901760
      %1527 = vmatmul.f32.gmra.mxu0 %v1526
      %v1528 = vpop.f32.mrf.mxu0
      %v1529 = vadd.f32 %v1488, %v1528
      %1530 = vdwg.mxu0
      %v1531 = vand.u32 %v1140, 4294901760
      %v1532 = vsub.f32 %v1140, %v1531
      %v1533 = vand.u32 %v1532, 4294901760
      %v1534 = vsub.f32 %v1532, %v1533
      %v1535 = vand.u32 %v1534, 4294901760
      %1536 = vmatpush.msra.mxu0 %v1535
      %v1537 = vand.u32 %v1138, 4294901760
      %v1538 = vsub.f32 %v1138, %v1537
      %v1539 = vand.u32 %v1538, 4294901760
      %v1540 = vsub.f32 %v1538, %v1539
      %v1541 = vand.u32 %v1540, 4294901760
      %1542 = vmatpush.msra.mxu0 %v1541
      %v1543 = vand.u32 %v1136, 4294901760
      %v1544 = vsub.f32 %v1136, %v1543
      %v1545 = vand.u32 %v1544, 4294901760
      %v1546 = vsub.f32 %v1544, %v1545
      %v1547 = vand.u32 %v1546, 4294901760
      %1548 = vmatpush.msra.mxu0 %v1547
      %v1549 = vand.u32 %v1134, 4294901760
      %v1550 = vsub.f32 %v1134, %v1549
      %v1551 = vand.u32 %v1550, 4294901760
      %v1552 = vsub.f32 %v1550, %v1551
      %v1553 = vand.u32 %v1552, 4294901760
      %1554 = vmatpush.msra.mxu0 %v1553
      %v1555 = vand.u32 %v1132, 4294901760
      %v1556 = vsub.f32 %v1132, %v1555
      %v1557 = vand.u32 %v1556, 4294901760
      %v1558 = vsub.f32 %v1556, %v1557
      %v1559 = vand.u32 %v1558, 4294901760
      %1560 = vmatpush.msra.mxu0 %v1559
      %v1561 = vand.u32 %v1130, 4294901760
      %v1562 = vsub.f32 %v1130, %v1561
      %v1563 = vand.u32 %v1562, 4294901760
      %v1564 = vsub.f32 %v1562, %v1563
      %v1565 = vand.u32 %v1564, 4294901760
      %1566 = vmatpush.msra.mxu0 %v1565
      %v1567 = vand.u32 %v1128, 4294901760
      %v1568 = vsub.f32 %v1128, %v1567
      %v1569 = vand.u32 %v1568, 4294901760
      %v1570 = vsub.f32 %v1568, %v1569
      %v1571 = vand.u32 %v1570, 4294901760
      %1572 = vmatpush.msra.mxu0 %v1571
      %v1573 = vand.u32 %v1126, 4294901760
      %v1574 = vsub.f32 %v1126, %v1573
      %v1575 = vand.u32 %v1574, 4294901760
      %v1576 = vsub.f32 %v1574, %v1575
      %v1577 = vand.u32 %v1576, 4294901760
      %1578 = vmatpush.msra.mxu0 %v1577
      %v1579 = vand.u32 %v1124, 4294901760
      %v1580 = vsub.f32 %v1124, %v1579
      %v1581 = vand.u32 %v1580, 4294901760
      %v1582 = vsub.f32 %v1580, %v1581
      %v1583 = vand.u32 %v1582, 4294901760
      %1584 = vmatpush.msra.mxu0 %v1583
      %v1585 = vand.u32 %v1122, 4294901760
      %v1586 = vsub.f32 %v1122, %v1585
      %v1587 = vand.u32 %v1586, 4294901760
      %v1588 = vsub.f32 %v1586, %v1587
      %v1589 = vand.u32 %v1588, 4294901760
      %1590 = vmatpush.msra.mxu0 %v1589
      %v1591 = vand.u32 %v1120, 4294901760
      %v1592 = vsub.f32 %v1120, %v1591
      %v1593 = vand.u32 %v1592, 4294901760
      %v1594 = vsub.f32 %v1592, %v1593
      %v1595 = vand.u32 %v1594, 4294901760
      %1596 = vmatpush.msra.mxu0 %v1595
      %v1597 = vand.u32 %v1118, 4294901760
      %v1598 = vsub.f32 %v1118, %v1597
      %v1599 = vand.u32 %v1598, 4294901760
      %v1600 = vsub.f32 %v1598, %v1599
      %v1601 = vand.u32 %v1600, 4294901760
      %1602 = vmatpush.msra.mxu0 %v1601
      %v1603 = vand.u32 %v1116, 4294901760
      %v1604 = vsub.f32 %v1116, %v1603
      %v1605 = vand.u32 %v1604, 4294901760
      %v1606 = vsub.f32 %v1604, %v1605
      %v1607 = vand.u32 %v1606, 4294901760
      %1608 = vmatpush.msra.mxu0 %v1607
      %v1609 = vand.u32 %v1114, 4294901760
      %v1610 = vsub.f32 %v1114, %v1609
      %v1611 = vand.u32 %v1610, 4294901760
      %v1612 = vsub.f32 %v1610, %v1611
      %v1613 = vand.u32 %v1612, 4294901760
      %1614 = vmatpush.msra.mxu0 %v1613
      %v1615 = vand.u32 %v1112, 4294901760
      %v1616 = vsub.f32 %v1112, %v1615
      %v1617 = vand.u32 %v1616, 4294901760
      %v1618 = vsub.f32 %v1616, %v1617
      %v1619 = vand.u32 %v1618, 4294901760
      %1620 = vmatpush.msra.mxu0 %v1619
      %v1621 = vand.u32 %v1110, 4294901760
      %v1622 = vsub.f32 %v1110, %v1621
      %v1623 = vand.u32 %v1622, 4294901760
      %v1624 = vsub.f32 %v1622, %v1623
      %v1625 = vand.u32 %v1624, 4294901760
      %1626 = vmatpush.msra.mxu0 %v1625
      %v1627 = vand.u32 %v1146, 4294901760
      %1628 = vmatmul.f32.gmra.mxu0 %v1627
      %v1629 = vpop.f32.mrf.mxu0
      %v1630 = vadd.f32 %v1529, %v1629
      %1631 = vdwg.mxu0
      %v1632 = vand.u32 %v1140, 4294901760
      %v1633 = vsub.f32 %v1140, %v1632
      %1634 = vmatpush.msra.mxu0 %v1633
      %v1635 = vand.u32 %v1138, 4294901760
      %v1636 = vsub.f32 %v1138, %v1635
      %1637 = vmatpush.msra.mxu0 %v1636
      %v1638 = vand.u32 %v1136, 4294901760
      %v1639 = vsub.f32 %v1136, %v1638
      %1640 = vmatpush.msra.mxu0 %v1639
      %v1641 = vand.u32 %v1134, 4294901760
      %v1642 = vsub.f32 %v1134, %v1641
      %1643 = vmatpush.msra.mxu0 %v1642
      %v1644 = vand.u32 %v1132, 4294901760
      %v1645 = vsub.f32 %v1132, %v1644
      %1646 = vmatpush.msra.mxu0 %v1645
      %v1647 = vand.u32 %v1130, 4294901760
      %v1648 = vsub.f32 %v1130, %v1647
      %1649 = vmatpush.msra.mxu0 %v1648
      %v1650 = vand.u32 %v1128, 4294901760
      %v1651 = vsub.f32 %v1128, %v1650
      %1652 = vmatpush.msra.mxu0 %v1651
      %v1653 = vand.u32 %v1126, 4294901760
      %v1654 = vsub.f32 %v1126, %v1653
      %1655 = vmatpush.msra.mxu0 %v1654
      %v1656 = vand.u32 %v1124, 4294901760
      %v1657 = vsub.f32 %v1124, %v1656
      %1658 = vmatpush.msra.mxu0 %v1657
      %v1659 = vand.u32 %v1122, 4294901760
      %v1660 = vsub.f32 %v1122, %v1659
      %1661 = vmatpush.msra.mxu0 %v1660
      %v1662 = vand.u32 %v1120, 4294901760
      %v1663 = vsub.f32 %v1120, %v1662
      %1664 = vmatpush.msra.mxu0 %v1663
      %v1665 = vand.u32 %v1118, 4294901760
      %v1666 = vsub.f32 %v1118, %v1665
      %1667 = vmatpush.msra.mxu0 %v1666
      %v1668 = vand.u32 %v1116, 4294901760
      %v1669 = vsub.f32 %v1116, %v1668
      %1670 = vmatpush.msra.mxu0 %v1669
      %v1671 = vand.u32 %v1114, 4294901760
      %v1672 = vsub.f32 %v1114, %v1671
      %1673 = vmatpush.msra.mxu0 %v1672
      %v1674 = vand.u32 %v1112, 4294901760
      %v1675 = vsub.f32 %v1112, %v1674
      %1676 = vmatpush.msra.mxu0 %v1675
      %v1677 = vand.u32 %v1110, 4294901760
      %v1678 = vsub.f32 %v1110, %v1677
      %1679 = vmatpush.msra.mxu0 %v1678
      %v1680 = vand.u32 %v1146, 4294901760
      %v1681 = vsub.f32 %v1146, %v1680
      %1682 = vmatmul.f32.gmra.mxu0 %v1681
      %v1683 = vpop.f32.mrf.mxu0
      %v1684 = vadd.f32 %v1630, %v1683
      %1685 = vdwg.mxu0
      %v1686 = vand.u32 %v1140, 4294901760
      %1687 = vmatpush.msra.mxu0 %v1686
      %v1688 = vand.u32 %v1138, 4294901760
      %1689 = vmatpush.msra.mxu0 %v1688
      %v1690 = vand.u32 %v1136, 4294901760
      %1691 = vmatpush.msra.mxu0 %v1690
      %v1692 = vand.u32 %v1134, 4294901760
      %1693 = vmatpush.msra.mxu0 %v1692
      %v1694 = vand.u32 %v1132, 4294901760
      %1695 = vmatpush.msra.mxu0 %v1694
      %v1696 = vand.u32 %v1130, 4294901760
      %1697 = vmatpush.msra.mxu0 %v1696
      %v1698 = vand.u32 %v1128, 4294901760
      %1699 = vmatpush.msra.mxu0 %v1698
      %v1700 = vand.u32 %v1126, 4294901760
      %1701 = vmatpush.msra.mxu0 %v1700
      %v1702 = vand.u32 %v1124, 4294901760
      %1703 = vmatpush.msra.mxu0 %v1702
      %v1704 = vand.u32 %v1122, 4294901760
      %1705 = vmatpush.msra.mxu0 %v1704
      %v1706 = vand.u32 %v1120, 4294901760
      %1707 = vmatpush.msra.mxu0 %v1706
      %v1708 = vand.u32 %v1118, 4294901760
      %1709 = vmatpush.msra.mxu0 %v1708
      %v1710 = vand.u32 %v1116, 4294901760
      %1711 = vmatpush.msra.mxu0 %v1710
      %v1712 = vand.u32 %v1114, 4294901760
      %1713 = vmatpush.msra.mxu0 %v1712
      %v1714 = vand.u32 %v1112, 4294901760
      %1715 = vmatpush.msra.mxu0 %v1714
      %v1716 = vand.u32 %v1110, 4294901760
      %1717 = vmatpush.msra.mxu0 %v1716
      %v1718 = vand.u32 %v1146, 4294901760
      %v1719 = vsub.f32 %v1146, %v1718
      %v1720 = vand.u32 %v1719, 4294901760
      %1721 = vmatmul.f32.gmra.mxu0 %v1720
      %v1722 = vpop.f32.mrf.mxu0
      %v1723 = vadd.f32 %v1684, %v1722
      %1724 = vdwg.mxu0
      %v1725 = vand.u32 %v1140, 4294901760
      %v1726 = vsub.f32 %v1140, %v1725
      %v1727 = vand.u32 %v1726, 4294901760
      %1728 = vmatpush.msra.mxu0 %v1727
      %v1729 = vand.u32 %v1138, 4294901760
      %v1730 = vsub.f32 %v1138, %v1729
      %v1731 = vand.u32 %v1730, 4294901760
      %1732 = vmatpush.msra.mxu0 %v1731
      %v1733 = vand.u32 %v1136, 4294901760
      %v1734 = vsub.f32 %v1136, %v1733
      %v1735 = vand.u32 %v1734, 4294901760
      %1736 = vmatpush.msra.mxu0 %v1735
      %v1737 = vand.u32 %v1134, 4294901760
      %v1738 = vsub.f32 %v1134, %v1737
      %v1739 = vand.u32 %v1738, 4294901760
      %1740 = vmatpush.msra.mxu0 %v1739
      %v1741 = vand.u32 %v1132, 4294901760
      %v1742 = vsub.f32 %v1132, %v1741
      %v1743 = vand.u32 %v1742, 4294901760
      %1744 = vmatpush.msra.mxu0 %v1743
      %v1745 = vand.u32 %v1130, 4294901760
      %v1746 = vsub.f32 %v1130, %v1745
      %v1747 = vand.u32 %v1746, 4294901760
      %1748 = vmatpush.msra.mxu0 %v1747
      %v1749 = vand.u32 %v1128, 4294901760
      %v1750 = vsub.f32 %v1128, %v1749
      %v1751 = vand.u32 %v1750, 4294901760
      %1752 = vmatpush.msra.mxu0 %v1751
      %v1753 = vand.u32 %v1126, 4294901760
      %v1754 = vsub.f32 %v1126, %v1753
      %v1755 = vand.u32 %v1754, 4294901760
      %1756 = vmatpush.msra.mxu0 %v1755
      %v1757 = vand.u32 %v1124, 4294901760
      %v1758 = vsub.f32 %v1124, %v1757
      %v1759 = vand.u32 %v1758, 4294901760
      %1760 = vmatpush.msra.mxu0 %v1759
      %v1761 = vand.u32 %v1122, 4294901760
      %v1762 = vsub.f32 %v1122, %v1761
      %v1763 = vand.u32 %v1762, 4294901760
      %1764 = vmatpush.msra.mxu0 %v1763
      %v1765 = vand.u32 %v1120, 4294901760
      %v1766 = vsub.f32 %v1120, %v1765
      %v1767 = vand.u32 %v1766, 4294901760
      %1768 = vmatpush.msra.mxu0 %v1767
      %v1769 = vand.u32 %v1118, 4294901760
      %v1770 = vsub.f32 %v1118, %v1769
      %v1771 = vand.u32 %v1770, 4294901760
      %1772 = vmatpush.msra.mxu0 %v1771
      %v1773 = vand.u32 %v1116, 4294901760
      %v1774 = vsub.f32 %v1116, %v1773
      %v1775 = vand.u32 %v1774, 4294901760
      %1776 = vmatpush.msra.mxu0 %v1775
      %v1777 = vand.u32 %v1114, 4294901760
      %v1778 = vsub.f32 %v1114, %v1777
      %v1779 = vand.u32 %v1778, 4294901760
      %1780 = vmatpush.msra.mxu0 %v1779
      %v1781 = vand.u32 %v1112, 4294901760
      %v1782 = vsub.f32 %v1112, %v1781
      %v1783 = vand.u32 %v1782, 4294901760
      %1784 = vmatpush.msra.mxu0 %v1783
      %v1785 = vand.u32 %v1110, 4294901760
      %v1786 = vsub.f32 %v1110, %v1785
      %v1787 = vand.u32 %v1786, 4294901760
      %1788 = vmatpush.msra.mxu0 %v1787
      %v1789 = vand.u32 %v1146, 4294901760
      %1790 = vmatmul.f32.gmra.mxu0 %v1789
      %v1791 = vpop.f32.mrf.mxu0
      %v1792 = vadd.f32 %v1723, %v1791
      %1793 = vdwg.mxu0
      %v1794 = vand.u32 %v1140, 4294901760
      %1795 = vmatpush.msra.mxu0 %v1794
      %v1796 = vand.u32 %v1138, 4294901760
      %1797 = vmatpush.msra.mxu0 %v1796
      %v1798 = vand.u32 %v1136, 4294901760
      %1799 = vmatpush.msra.mxu0 %v1798
      %v1800 = vand.u32 %v1134, 4294901760
      %1801 = vmatpush.msra.mxu0 %v1800
      %v1802 = vand.u32 %v1132, 4294901760
      %1803 = vmatpush.msra.mxu0 %v1802
      %v1804 = vand.u32 %v1130, 4294901760
      %1805 = vmatpush.msra.mxu0 %v1804
      %v1806 = vand.u32 %v1128, 4294901760
      %1807 = vmatpush.msra.mxu0 %v1806
      %v1808 = vand.u32 %v1126, 4294901760
      %1809 = vmatpush.msra.mxu0 %v1808
      %v1810 = vand.u32 %v1124, 4294901760
      %1811 = vmatpush.msra.mxu0 %v1810
      %v1812 = vand.u32 %v1122, 4294901760
      %1813 = vmatpush.msra.mxu0 %v1812
      %v1814 = vand.u32 %v1120, 4294901760
      %1815 = vmatpush.msra.mxu0 %v1814
      %v1816 = vand.u32 %v1118, 4294901760
      %1817 = vmatpush.msra.mxu0 %v1816
      %v1818 = vand.u32 %v1116, 4294901760
      %1819 = vmatpush.msra.mxu0 %v1818
      %v1820 = vand.u32 %v1114, 4294901760
      %1821 = vmatpush.msra.mxu0 %v1820
      %v1822 = vand.u32 %v1112, 4294901760
      %1823 = vmatpush.msra.mxu0 %v1822
      %v1824 = vand.u32 %v1110, 4294901760
      %1825 = vmatpush.msra.mxu0 %v1824
      %v1826 = vand.u32 %v1146, 4294901760
      %1827 = vmatmul.f32.gmra.mxu0 %v1826
      %v1828 = vpop.f32.mrf.mxu0
      %v1829 = vadd.f32 %v1792, %v1828
      %1830 = vdwg.mxu0
      %v1831 = vand.u32 %v1109, 4294901760
      %1832 = vmatpush.msra.mxu0 %v1831
      %v1833 = vand.u32 %v1107, 4294901760
      %1834 = vmatpush.msra.mxu0 %v1833
      %v1835 = vand.u32 %v1105, 4294901760
      %1836 = vmatpush.msra.mxu0 %v1835
      %v1837 = vand.u32 %v1103, 4294901760
      %1838 = vmatpush.msra.mxu0 %v1837
      %v1839 = vand.u32 %v1101, 4294901760
      %1840 = vmatpush.msra.mxu0 %v1839
      %v1841 = vand.u32 %v1099, 4294901760
      %1842 = vmatpush.msra.mxu0 %v1841
      %v1843 = vand.u32 %v1097, 4294901760
      %1844 = vmatpush.msra.mxu0 %v1843
      %v1845 = vand.u32 %v1095, 4294901760
      %1846 = vmatpush.msra.mxu0 %v1845
      %v1847 = vand.u32 %v1093, 4294901760
      %1848 = vmatpush.msra.mxu0 %v1847
      %v1849 = vand.u32 %v1091, 4294901760
      %1850 = vmatpush.msra.mxu0 %v1849
      %v1851 = vand.u32 %v1089, 4294901760
      %1852 = vmatpush.msra.mxu0 %v1851
      %v1853 = vand.u32 %v1087, 4294901760
      %1854 = vmatpush.msra.mxu0 %v1853
      %v1855 = vand.u32 %v1085, 4294901760
      %1856 = vmatpush.msra.mxu0 %v1855
      %v1857 = vand.u32 %v1083, 4294901760
      %1858 = vmatpush.msra.mxu0 %v1857
      %v1859 = vand.u32 %v1081, 4294901760
      %1860 = vmatpush.msra.mxu0 %v1859
      %v1861 = vand.u32 %v1079, 4294901760
      %1862 = vmatpush.msra.mxu0 %v1861
      %v1863 = vand.u32 %v1145, 4294901760
      %v1864 = vsub.f32 %v1145, %v1863
      %v1865 = vand.u32 %v1864, 4294901760
      %v1866 = vsub.f32 %v1864, %v1865
      %v1867 = vand.u32 %v1866, 4294901760
      %1868 = vmatmul.f32.gmra.mxu0 %v1867
      %v1869 = vpop.f32.mrf.mxu0
      %v1870 = vadd.f32 0.0, %v1869
      %1871 = vdwg.mxu0
      %v1872 = vand.u32 %v1109, 4294901760
      %v1873 = vsub.f32 %v1109, %v1872
      %v1874 = vand.u32 %v1873, 4294901760
      %v1875 = vsub.f32 %v1873, %v1874
      %v1876 = vand.u32 %v1875, 4294901760
      %1877 = vmatpush.msra.mxu0 %v1876
      %v1878 = vand.u32 %v1107, 4294901760
      %v1879 = vsub.f32 %v1107, %v1878
      %v1880 = vand.u32 %v1879, 4294901760
      %v1881 = vsub.f32 %v1879, %v1880
      %v1882 = vand.u32 %v1881, 4294901760
      %1883 = vmatpush.msra.mxu0 %v1882
      %v1884 = vand.u32 %v1105, 4294901760
      %v1885 = vsub.f32 %v1105, %v1884
      %v1886 = vand.u32 %v1885, 4294901760
      %v1887 = vsub.f32 %v1885, %v1886
      %v1888 = vand.u32 %v1887, 4294901760
      %1889 = vmatpush.msra.mxu0 %v1888
      %v1890 = vand.u32 %v1103, 4294901760
      %v1891 = vsub.f32 %v1103, %v1890
      %v1892 = vand.u32 %v1891, 4294901760
      %v1893 = vsub.f32 %v1891, %v1892
      %v1894 = vand.u32 %v1893, 4294901760
      %1895 = vmatpush.msra.mxu0 %v1894
      %v1896 = vand.u32 %v1101, 4294901760
      %v1897 = vsub.f32 %v1101, %v1896
      %v1898 = vand.u32 %v1897, 4294901760
      %v1899 = vsub.f32 %v1897, %v1898
      %v1900 = vand.u32 %v1899, 4294901760
      %1901 = vmatpush.msra.mxu0 %v1900
      %v1902 = vand.u32 %v1099, 4294901760
      %v1903 = vsub.f32 %v1099, %v1902
      %v1904 = vand.u32 %v1903, 4294901760
      %v1905 = vsub.f32 %v1903, %v1904
      %v1906 = vand.u32 %v1905, 4294901760
      %1907 = vmatpush.msra.mxu0 %v1906
      %v1908 = vand.u32 %v1097, 4294901760
      %v1909 = vsub.f32 %v1097, %v1908
      %v1910 = vand.u32 %v1909, 4294901760
      %v1911 = vsub.f32 %v1909, %v1910
      %v1912 = vand.u32 %v1911, 4294901760
      %1913 = vmatpush.msra.mxu0 %v1912
      %v1914 = vand.u32 %v1095, 4294901760
      %v1915 = vsub.f32 %v1095, %v1914
      %v1916 = vand.u32 %v1915, 4294901760
      %v1917 = vsub.f32 %v1915, %v1916
      %v1918 = vand.u32 %v1917, 4294901760
      %1919 = vmatpush.msra.mxu0 %v1918
      %v1920 = vand.u32 %v1093, 4294901760
      %v1921 = vsub.f32 %v1093, %v1920
      %v1922 = vand.u32 %v1921, 4294901760
      %v1923 = vsub.f32 %v1921, %v1922
      %v1924 = vand.u32 %v1923, 4294901760
      %1925 = vmatpush.msra.mxu0 %v1924
      %v1926 = vand.u32 %v1091, 4294901760
      %v1927 = vsub.f32 %v1091, %v1926
      %v1928 = vand.u32 %v1927, 4294901760
      %v1929 = vsub.f32 %v1927, %v1928
      %v1930 = vand.u32 %v1929, 4294901760
      %1931 = vmatpush.msra.mxu0 %v1930
      %v1932 = vand.u32 %v1089, 4294901760
      %v1933 = vsub.f32 %v1089, %v1932
      %v1934 = vand.u32 %v1933, 4294901760
      %v1935 = vsub.f32 %v1933, %v1934
      %v1936 = vand.u32 %v1935, 4294901760
      %1937 = vmatpush.msra.mxu0 %v1936
      %v1938 = vand.u32 %v1087, 4294901760
      %v1939 = vsub.f32 %v1087, %v1938
      %v1940 = vand.u32 %v1939, 4294901760
      %v1941 = vsub.f32 %v1939, %v1940
      %v1942 = vand.u32 %v1941, 4294901760
      %1943 = vmatpush.msra.mxu0 %v1942
      %v1944 = vand.u32 %v1085, 4294901760
      %v1945 = vsub.f32 %v1085, %v1944
      %v1946 = vand.u32 %v1945, 4294901760
      %v1947 = vsub.f32 %v1945, %v1946
      %v1948 = vand.u32 %v1947, 4294901760
      %1949 = vmatpush.msra.mxu0 %v1948
      %v1950 = vand.u32 %v1083, 4294901760
      %v1951 = vsub.f32 %v1083, %v1950
      %v1952 = vand.u32 %v1951, 4294901760
      %v1953 = vsub.f32 %v1951, %v1952
      %v1954 = vand.u32 %v1953, 4294901760
      %1955 = vmatpush.msra.mxu0 %v1954
      %v1956 = vand.u32 %v1081, 4294901760
      %v1957 = vsub.f32 %v1081, %v1956
      %v1958 = vand.u32 %v1957, 4294901760
      %v1959 = vsub.f32 %v1957, %v1958
      %v1960 = vand.u32 %v1959, 4294901760
      %1961 = vmatpush.msra.mxu0 %v1960
      %v1962 = vand.u32 %v1079, 4294901760
      %v1963 = vsub.f32 %v1079, %v1962
      %v1964 = vand.u32 %v1963, 4294901760
      %v1965 = vsub.f32 %v1963, %v1964
      %v1966 = vand.u32 %v1965, 4294901760
      %1967 = vmatpush.msra.mxu0 %v1966
      %v1968 = vand.u32 %v1145, 4294901760
      %1969 = vmatmul.f32.gmra.mxu0 %v1968
      %v1970 = vpop.f32.mrf.mxu0
      %v1971 = vadd.f32 %v1870, %v1970
      %1972 = vdwg.mxu0
      %v1973 = vand.u32 %v1109, 4294901760
      %v1974 = vsub.f32 %v1109, %v1973
      %1975 = vmatpush.msra.mxu0 %v1974
      %v1976 = vand.u32 %v1107, 4294901760
      %v1977 = vsub.f32 %v1107, %v1976
      %1978 = vmatpush.msra.mxu0 %v1977
      %v1979 = vand.u32 %v1105, 4294901760
      %v1980 = vsub.f32 %v1105, %v1979
      %1981 = vmatpush.msra.mxu0 %v1980
      %v1982 = vand.u32 %v1103, 4294901760
      %v1983 = vsub.f32 %v1103, %v1982
      %1984 = vmatpush.msra.mxu0 %v1983
      %v1985 = vand.u32 %v1101, 4294901760
      %v1986 = vsub.f32 %v1101, %v1985
      %1987 = vmatpush.msra.mxu0 %v1986
      %v1988 = vand.u32 %v1099, 4294901760
      %v1989 = vsub.f32 %v1099, %v1988
      %1990 = vmatpush.msra.mxu0 %v1989
      %v1991 = vand.u32 %v1097, 4294901760
      %v1992 = vsub.f32 %v1097, %v1991
      %1993 = vmatpush.msra.mxu0 %v1992
      %v1994 = vand.u32 %v1095, 4294901760
      %v1995 = vsub.f32 %v1095, %v1994
      %1996 = vmatpush.msra.mxu0 %v1995
      %v1997 = vand.u32 %v1093, 4294901760
      %v1998 = vsub.f32 %v1093, %v1997
      %1999 = vmatpush.msra.mxu0 %v1998
      %v2000 = vand.u32 %v1091, 4294901760
      %v2001 = vsub.f32 %v1091, %v2000
      %2002 = vmatpush.msra.mxu0 %v2001
      %v2003 = vand.u32 %v1089, 4294901760
      %v2004 = vsub.f32 %v1089, %v2003
      %2005 = vmatpush.msra.mxu0 %v2004
      %v2006 = vand.u32 %v1087, 4294901760
      %v2007 = vsub.f32 %v1087, %v2006
      %2008 = vmatpush.msra.mxu0 %v2007
      %v2009 = vand.u32 %v1085, 4294901760
      %v2010 = vsub.f32 %v1085, %v2009
      %2011 = vmatpush.msra.mxu0 %v2010
      %v2012 = vand.u32 %v1083, 4294901760
      %v2013 = vsub.f32 %v1083, %v2012
      %2014 = vmatpush.msra.mxu0 %v2013
      %v2015 = vand.u32 %v1081, 4294901760
      %v2016 = vsub.f32 %v1081, %v2015
      %2017 = vmatpush.msra.mxu0 %v2016
      %v2018 = vand.u32 %v1079, 4294901760
      %v2019 = vsub.f32 %v1079, %v2018
      %2020 = vmatpush.msra.mxu0 %v2019
      %v2021 = vand.u32 %v1145, 4294901760
      %v2022 = vsub.f32 %v1145, %v2021
      %2023 = vmatmul.f32.gmra.mxu0 %v2022
      %v2024 = vpop.f32.mrf.mxu0
      %v2025 = vadd.f32 %v1971, %v2024
      %2026 = vdwg.mxu0
      %v2027 = vand.u32 %v1109, 4294901760
      %2028 = vmatpush.msra.mxu0 %v2027
      %v2029 = vand.u32 %v1107, 4294901760
      %2030 = vmatpush.msra.mxu0 %v2029
      %v2031 = vand.u32 %v1105, 4294901760
      %2032 = vmatpush.msra.mxu0 %v2031
      %v2033 = vand.u32 %v1103, 4294901760
      %2034 = vmatpush.msra.mxu0 %v2033
      %v2035 = vand.u32 %v1101, 4294901760
      %2036 = vmatpush.msra.mxu0 %v2035
      %v2037 = vand.u32 %v1099, 4294901760
      %2038 = vmatpush.msra.mxu0 %v2037
      %v2039 = vand.u32 %v1097, 4294901760
      %2040 = vmatpush.msra.mxu0 %v2039
      %v2041 = vand.u32 %v1095, 4294901760
      %2042 = vmatpush.msra.mxu0 %v2041
      %v2043 = vand.u32 %v1093, 4294901760
      %2044 = vmatpush.msra.mxu0 %v2043
      %v2045 = vand.u32 %v1091, 4294901760
      %2046 = vmatpush.msra.mxu0 %v2045
      %v2047 = vand.u32 %v1089, 4294901760
      %2048 = vmatpush.msra.mxu0 %v2047
      %v2049 = vand.u32 %v1087, 4294901760
      %2050 = vmatpush.msra.mxu0 %v2049
      %v2051 = vand.u32 %v1085, 4294901760
      %2052 = vmatpush.msra.mxu0 %v2051
      %v2053 = vand.u32 %v1083, 4294901760
      %2054 = vmatpush.msra.mxu0 %v2053
      %v2055 = vand.u32 %v1081, 4294901760
      %2056 = vmatpush.msra.mxu0 %v2055
      %v2057 = vand.u32 %v1079, 4294901760
      %2058 = vmatpush.msra.mxu0 %v2057
      %v2059 = vand.u32 %v1145, 4294901760
      %v2060 = vsub.f32 %v1145, %v2059
      %v2061 = vand.u32 %v2060, 4294901760
      %2062 = vmatmul.f32.gmra.mxu0 %v2061
      %v2063 = vpop.f32.mrf.mxu0
      %v2064 = vadd.f32 %v2025, %v2063
      %2065 = vdwg.mxu0
      %v2066 = vand.u32 %v1109, 4294901760
      %v2067 = vsub.f32 %v1109, %v2066
      %v2068 = vand.u32 %v2067, 4294901760
      %2069 = vmatpush.msra.mxu0 %v2068
      %v2070 = vand.u32 %v1107, 4294901760
      %v2071 = vsub.f32 %v1107, %v2070
      %v2072 = vand.u32 %v2071, 4294901760
      %2073 = vmatpush.msra.mxu0 %v2072
      %v2074 = vand.u32 %v1105, 4294901760
      %v2075 = vsub.f32 %v1105, %v2074
      %v2076 = vand.u32 %v2075, 4294901760
      %2077 = vmatpush.msra.mxu0 %v2076
      %v2078 = vand.u32 %v1103, 4294901760
      %v2079 = vsub.f32 %v1103, %v2078
      %v2080 = vand.u32 %v2079, 4294901760
      %2081 = vmatpush.msra.mxu0 %v2080
      %v2082 = vand.u32 %v1101, 4294901760
      %v2083 = vsub.f32 %v1101, %v2082
      %v2084 = vand.u32 %v2083, 4294901760
      %2085 = vmatpush.msra.mxu0 %v2084
      %v2086 = vand.u32 %v1099, 4294901760
      %v2087 = vsub.f32 %v1099, %v2086
      %v2088 = vand.u32 %v2087, 4294901760
      %2089 = vmatpush.msra.mxu0 %v2088
      %v2090 = vand.u32 %v1097, 4294901760
      %v2091 = vsub.f32 %v1097, %v2090
      %v2092 = vand.u32 %v2091, 4294901760
      %2093 = vmatpush.msra.mxu0 %v2092
      %v2094 = vand.u32 %v1095, 4294901760
      %v2095 = vsub.f32 %v1095, %v2094
      %v2096 = vand.u32 %v2095, 4294901760
      %2097 = vmatpush.msra.mxu0 %v2096
      %v2098 = vand.u32 %v1093, 4294901760
      %v2099 = vsub.f32 %v1093, %v2098
      %v2100 = vand.u32 %v2099, 4294901760
      %2101 = vmatpush.msra.mxu0 %v2100
      %v2102 = vand.u32 %v1091, 4294901760
      %v2103 = vsub.f32 %v1091, %v2102
      %v2104 = vand.u32 %v2103, 4294901760
      %2105 = vmatpush.msra.mxu0 %v2104
      %v2106 = vand.u32 %v1089, 4294901760
      %v2107 = vsub.f32 %v1089, %v2106
      %v2108 = vand.u32 %v2107, 4294901760
      %2109 = vmatpush.msra.mxu0 %v2108
      %v2110 = vand.u32 %v1087, 4294901760
      %v2111 = vsub.f32 %v1087, %v2110
      %v2112 = vand.u32 %v2111, 4294901760
      %2113 = vmatpush.msra.mxu0 %v2112
      %v2114 = vand.u32 %v1085, 4294901760
      %v2115 = vsub.f32 %v1085, %v2114
      %v2116 = vand.u32 %v2115, 4294901760
      %2117 = vmatpush.msra.mxu0 %v2116
      %v2118 = vand.u32 %v1083, 4294901760
      %v2119 = vsub.f32 %v1083, %v2118
      %v2120 = vand.u32 %v2119, 4294901760
      %2121 = vmatpush.msra.mxu0 %v2120
      %v2122 = vand.u32 %v1081, 4294901760
      %v2123 = vsub.f32 %v1081, %v2122
      %v2124 = vand.u32 %v2123, 4294901760
      %2125 = vmatpush.msra.mxu0 %v2124
      %v2126 = vand.u32 %v1079, 4294901760
      %v2127 = vsub.f32 %v1079, %v2126
      %v2128 = vand.u32 %v2127, 4294901760
      %2129 = vmatpush.msra.mxu0 %v2128
      %v2130 = vand.u32 %v1145, 4294901760
      %2131 = vmatmul.f32.gmra.mxu0 %v2130
      %v2132 = vpop.f32.mrf.mxu0
      %v2133 = vadd.f32 %v2064, %v2132
      %2134 = vdwg.mxu0
      %v2135 = vand.u32 %v1109, 4294901760
      %2136 = vmatpush.msra.mxu0 %v2135
      %v2137 = vand.u32 %v1107, 4294901760
      %2138 = vmatpush.msra.mxu0 %v2137
      %v2139 = vand.u32 %v1105, 4294901760
      %2140 = vmatpush.msra.mxu0 %v2139
      %v2141 = vand.u32 %v1103, 4294901760
      %2142 = vmatpush.msra.mxu0 %v2141
      %v2143 = vand.u32 %v1101, 4294901760
      %2144 = vmatpush.msra.mxu0 %v2143
      %v2145 = vand.u32 %v1099, 4294901760
      %2146 = vmatpush.msra.mxu0 %v2145
      %v2147 = vand.u32 %v1097, 4294901760
      %2148 = vmatpush.msra.mxu0 %v2147
      %v2149 = vand.u32 %v1095, 4294901760
      %2150 = vmatpush.msra.mxu0 %v2149
      %v2151 = vand.u32 %v1093, 4294901760
      %2152 = vmatpush.msra.mxu0 %v2151
      %v2153 = vand.u32 %v1091, 4294901760
      %2154 = vmatpush.msra.mxu0 %v2153
      %v2155 = vand.u32 %v1089, 4294901760
      %2156 = vmatpush.msra.mxu0 %v2155
      %v2157 = vand.u32 %v1087, 4294901760
      %2158 = vmatpush.msra.mxu0 %v2157
      %v2159 = vand.u32 %v1085, 4294901760
      %2160 = vmatpush.msra.mxu0 %v2159
      %v2161 = vand.u32 %v1083, 4294901760
      %2162 = vmatpush.msra.mxu0 %v2161
      %v2163 = vand.u32 %v1081, 4294901760
      %2164 = vmatpush.msra.mxu0 %v2163
      %v2165 = vand.u32 %v1079, 4294901760
      %2166 = vmatpush.msra.mxu0 %v2165
      %v2167 = vand.u32 %v1145, 4294901760
      %2168 = vmatmul.f32.gmra.mxu0 %v2167
      %v2169 = vpop.f32.mrf.mxu0
      %v2170 = vadd.f32 %v2133, %v2169
      %2171 = vdwg.mxu0
      %v2172 = vand.u32 %v1141, 4294901760
      %2173 = vmatpush.msra.mxu0 %v2172
      %v2174 = vand.u32 %v1139, 4294901760
      %2175 = vmatpush.msra.mxu0 %v2174
      %v2176 = vand.u32 %v1137, 4294901760
      %2177 = vmatpush.msra.mxu0 %v2176
      %v2178 = vand.u32 %v1135, 4294901760
      %2179 = vmatpush.msra.mxu0 %v2178
      %v2180 = vand.u32 %v1133, 4294901760
      %2181 = vmatpush.msra.mxu0 %v2180
      %v2182 = vand.u32 %v1131, 4294901760
      %2183 = vmatpush.msra.mxu0 %v2182
      %v2184 = vand.u32 %v1129, 4294901760
      %2185 = vmatpush.msra.mxu0 %v2184
      %v2186 = vand.u32 %v1127, 4294901760
      %2187 = vmatpush.msra.mxu0 %v2186
      %v2188 = vand.u32 %v1125, 4294901760
      %2189 = vmatpush.msra.mxu0 %v2188
      %v2190 = vand.u32 %v1123, 4294901760
      %2191 = vmatpush.msra.mxu0 %v2190
      %v2192 = vand.u32 %v1121, 4294901760
      %2193 = vmatpush.msra.mxu0 %v2192
      %v2194 = vand.u32 %v1119, 4294901760
      %2195 = vmatpush.msra.mxu0 %v2194
      %v2196 = vand.u32 %v1117, 4294901760
      %2197 = vmatpush.msra.mxu0 %v2196
      %v2198 = vand.u32 %v1115, 4294901760
      %2199 = vmatpush.msra.mxu0 %v2198
      %v2200 = vand.u32 %v1113, 4294901760
      %2201 = vmatpush.msra.mxu0 %v2200
      %v2202 = vand.u32 %v1111, 4294901760
      %2203 = vmatpush.msra.mxu0 %v2202
      %v2204 = vand.u32 %v1146, 4294901760
      %v2205 = vsub.f32 %v1146, %v2204
      %v2206 = vand.u32 %v2205, 4294901760
      %v2207 = vsub.f32 %v2205, %v2206
      %v2208 = vand.u32 %v2207, 4294901760
      %2209 = vmatmul.f32.gmra.mxu0 %v2208
      %v2210 = vpop.f32.mrf.mxu0
      %v2211 = vadd.f32 %v2170, %v2210
      %2212 = vdwg.mxu0
      %v2213 = vand.u32 %v1141, 4294901760
      %v2214 = vsub.f32 %v1141, %v2213
      %v2215 = vand.u32 %v2214, 4294901760
      %v2216 = vsub.f32 %v2214, %v2215
      %v2217 = vand.u32 %v2216, 4294901760
      %2218 = vmatpush.msra.mxu0 %v2217
      %v2219 = vand.u32 %v1139, 4294901760
      %v2220 = vsub.f32 %v1139, %v2219
      %v2221 = vand.u32 %v2220, 4294901760
      %v2222 = vsub.f32 %v2220, %v2221
      %v2223 = vand.u32 %v2222, 4294901760
      %2224 = vmatpush.msra.mxu0 %v2223
      %v2225 = vand.u32 %v1137, 4294901760
      %v2226 = vsub.f32 %v1137, %v2225
      %v2227 = vand.u32 %v2226, 4294901760
      %v2228 = vsub.f32 %v2226, %v2227
      %v2229 = vand.u32 %v2228, 4294901760
      %2230 = vmatpush.msra.mxu0 %v2229
      %v2231 = vand.u32 %v1135, 4294901760
      %v2232 = vsub.f32 %v1135, %v2231
      %v2233 = vand.u32 %v2232, 4294901760
      %v2234 = vsub.f32 %v2232, %v2233
      %v2235 = vand.u32 %v2234, 4294901760
      %2236 = vmatpush.msra.mxu0 %v2235
      %v2237 = vand.u32 %v1133, 4294901760
      %v2238 = vsub.f32 %v1133, %v2237
      %v2239 = vand.u32 %v2238, 4294901760
      %v2240 = vsub.f32 %v2238, %v2239
      %v2241 = vand.u32 %v2240, 4294901760
      %2242 = vmatpush.msra.mxu0 %v2241
      %v2243 = vand.u32 %v1131, 4294901760
      %v2244 = vsub.f32 %v1131, %v2243
      %v2245 = vand.u32 %v2244, 4294901760
      %v2246 = vsub.f32 %v2244, %v2245
      %v2247 = vand.u32 %v2246, 4294901760
      %2248 = vmatpush.msra.mxu0 %v2247
      %v2249 = vand.u32 %v1129, 4294901760
      %v2250 = vsub.f32 %v1129, %v2249
      %v2251 = vand.u32 %v2250, 4294901760
      %v2252 = vsub.f32 %v2250, %v2251
      %v2253 = vand.u32 %v2252, 4294901760
      %2254 = vmatpush.msra.mxu0 %v2253
      %v2255 = vand.u32 %v1127, 4294901760
      %v2256 = vsub.f32 %v1127, %v2255
      %v2257 = vand.u32 %v2256, 4294901760
      %v2258 = vsub.f32 %v2256, %v2257
      %v2259 = vand.u32 %v2258, 4294901760
      %2260 = vmatpush.msra.mxu0 %v2259
      %v2261 = vand.u32 %v1125, 4294901760
      %v2262 = vsub.f32 %v1125, %v2261
      %v2263 = vand.u32 %v2262, 4294901760
      %v2264 = vsub.f32 %v2262, %v2263
      %v2265 = vand.u32 %v2264, 4294901760
      %2266 = vmatpush.msra.mxu0 %v2265
      %v2267 = vand.u32 %v1123, 4294901760
      %v2268 = vsub.f32 %v1123, %v2267
      %v2269 = vand.u32 %v2268, 4294901760
      %v2270 = vsub.f32 %v2268, %v2269
      %v2271 = vand.u32 %v2270, 4294901760
      %2272 = vmatpush.msra.mxu0 %v2271
      %v2273 = vand.u32 %v1121, 4294901760
      %v2274 = vsub.f32 %v1121, %v2273
      %v2275 = vand.u32 %v2274, 4294901760
      %v2276 = vsub.f32 %v2274, %v2275
      %v2277 = vand.u32 %v2276, 4294901760
      %2278 = vmatpush.msra.mxu0 %v2277
      %v2279 = vand.u32 %v1119, 4294901760
      %v2280 = vsub.f32 %v1119, %v2279
      %v2281 = vand.u32 %v2280, 4294901760
      %v2282 = vsub.f32 %v2280, %v2281
      %v2283 = vand.u32 %v2282, 4294901760
      %2284 = vmatpush.msra.mxu0 %v2283
      %v2285 = vand.u32 %v1117, 4294901760
      %v2286 = vsub.f32 %v1117, %v2285
      %v2287 = vand.u32 %v2286, 4294901760
      %v2288 = vsub.f32 %v2286, %v2287
      %v2289 = vand.u32 %v2288, 4294901760
      %2290 = vmatpush.msra.mxu0 %v2289
      %v2291 = vand.u32 %v1115, 4294901760
      %v2292 = vsub.f32 %v1115, %v2291
      %v2293 = vand.u32 %v2292, 4294901760
      %v2294 = vsub.f32 %v2292, %v2293
      %v2295 = vand.u32 %v2294, 4294901760
      %2296 = vmatpush.msra.mxu0 %v2295
      %v2297 = vand.u32 %v1113, 4294901760
      %v2298 = vsub.f32 %v1113, %v2297
      %v2299 = vand.u32 %v2298, 4294901760
      %v2300 = vsub.f32 %v2298, %v2299
      %v2301 = vand.u32 %v2300, 4294901760
      %2302 = vmatpush.msra.mxu0 %v2301
      %v2303 = vand.u32 %v1111, 4294901760
      %v2304 = vsub.f32 %v1111, %v2303
      %v2305 = vand.u32 %v2304, 4294901760
      %v2306 = vsub.f32 %v2304, %v2305
      %v2307 = vand.u32 %v2306, 4294901760
      %2308 = vmatpush.msra.mxu0 %v2307
      %v2309 = vand.u32 %v1146, 4294901760
      %2310 = vmatmul.f32.gmra.mxu0 %v2309
      %v2311 = vpop.f32.mrf.mxu0
      %v2312 = vadd.f32 %v2211, %v2311
      %2313 = vdwg.mxu0
      %v2314 = vand.u32 %v1141, 4294901760
      %v2315 = vsub.f32 %v1141, %v2314
      %2316 = vmatpush.msra.mxu0 %v2315
      %v2317 = vand.u32 %v1139, 4294901760
      %v2318 = vsub.f32 %v1139, %v2317
      %2319 = vmatpush.msra.mxu0 %v2318
      %v2320 = vand.u32 %v1137, 4294901760
      %v2321 = vsub.f32 %v1137, %v2320
      %2322 = vmatpush.msra.mxu0 %v2321
      %v2323 = vand.u32 %v1135, 4294901760
      %v2324 = vsub.f32 %v1135, %v2323
      %2325 = vmatpush.msra.mxu0 %v2324
      %v2326 = vand.u32 %v1133, 4294901760
      %v2327 = vsub.f32 %v1133, %v2326
      %2328 = vmatpush.msra.mxu0 %v2327
      %v2329 = vand.u32 %v1131, 4294901760
      %v2330 = vsub.f32 %v1131, %v2329
      %2331 = vmatpush.msra.mxu0 %v2330
      %v2332 = vand.u32 %v1129, 4294901760
      %v2333 = vsub.f32 %v1129, %v2332
      %2334 = vmatpush.msra.mxu0 %v2333
      %v2335 = vand.u32 %v1127, 4294901760
      %v2336 = vsub.f32 %v1127, %v2335
      %2337 = vmatpush.msra.mxu0 %v2336
      %v2338 = vand.u32 %v1125, 4294901760
      %v2339 = vsub.f32 %v1125, %v2338
      %2340 = vmatpush.msra.mxu0 %v2339
      %v2341 = vand.u32 %v1123, 4294901760
      %v2342 = vsub.f32 %v1123, %v2341
      %2343 = vmatpush.msra.mxu0 %v2342
      %v2344 = vand.u32 %v1121, 4294901760
      %v2345 = vsub.f32 %v1121, %v2344
      %2346 = vmatpush.msra.mxu0 %v2345
      %v2347 = vand.u32 %v1119, 4294901760
      %v2348 = vsub.f32 %v1119, %v2347
      %2349 = vmatpush.msra.mxu0 %v2348
      %v2350 = vand.u32 %v1117, 4294901760
      %v2351 = vsub.f32 %v1117, %v2350
      %2352 = vmatpush.msra.mxu0 %v2351
      %v2353 = vand.u32 %v1115, 4294901760
      %v2354 = vsub.f32 %v1115, %v2353
      %2355 = vmatpush.msra.mxu0 %v2354
      %v2356 = vand.u32 %v1113, 4294901760
      %v2357 = vsub.f32 %v1113, %v2356
      %2358 = vmatpush.msra.mxu0 %v2357
      %v2359 = vand.u32 %v1111, 4294901760
      %v2360 = vsub.f32 %v1111, %v2359
      %2361 = vmatpush.msra.mxu0 %v2360
      %v2362 = vand.u32 %v1146, 4294901760
      %v2363 = vsub.f32 %v1146, %v2362
      %2364 = vmatmul.f32.gmra.mxu0 %v2363
      %v2365 = vpop.f32.mrf.mxu0
      %v2366 = vadd.f32 %v2312, %v2365
      %2367 = vdwg.mxu0
      %v2368 = vand.u32 %v1141, 4294901760
      %2369 = vmatpush.msra.mxu0 %v2368
      %v2370 = vand.u32 %v1139, 4294901760
      %2371 = vmatpush.msra.mxu0 %v2370
      %v2372 = vand.u32 %v1137, 4294901760
      %2373 = vmatpush.msra.mxu0 %v2372
      %v2374 = vand.u32 %v1135, 4294901760
      %2375 = vmatpush.msra.mxu0 %v2374
      %v2376 = vand.u32 %v1133, 4294901760
      %2377 = vmatpush.msra.mxu0 %v2376
      %v2378 = vand.u32 %v1131, 4294901760
      %2379 = vmatpush.msra.mxu0 %v2378
      %v2380 = vand.u32 %v1129, 4294901760
      %2381 = vmatpush.msra.mxu0 %v2380
      %v2382 = vand.u32 %v1127, 4294901760
      %2383 = vmatpush.msra.mxu0 %v2382
      %v2384 = vand.u32 %v1125, 4294901760
      %2385 = vmatpush.msra.mxu0 %v2384
      %v2386 = vand.u32 %v1123, 4294901760
      %2387 = vmatpush.msra.mxu0 %v2386
      %v2388 = vand.u32 %v1121, 4294901760
      %2389 = vmatpush.msra.mxu0 %v2388
      %v2390 = vand.u32 %v1119, 4294901760
      %2391 = vmatpush.msra.mxu0 %v2390
      %v2392 = vand.u32 %v1117, 4294901760
      %2393 = vmatpush.msra.mxu0 %v2392
      %v2394 = vand.u32 %v1115, 4294901760
      %2395 = vmatpush.msra.mxu0 %v2394
      %v2396 = vand.u32 %v1113, 4294901760
      %2397 = vmatpush.msra.mxu0 %v2396
      %v2398 = vand.u32 %v1111, 4294901760
      %2399 = vmatpush.msra.mxu0 %v2398
      %v2400 = vand.u32 %v1146, 4294901760
      %v2401 = vsub.f32 %v1146, %v2400
      %v2402 = vand.u32 %v2401, 4294901760
      %2403 = vmatmul.f32.gmra.mxu0 %v2402
      %v2404 = vpop.f32.mrf.mxu0
      %v2405 = vadd.f32 %v2366, %v2404
      %2406 = vdwg.mxu0
      %v2407 = vand.u32 %v1141, 4294901760
      %v2408 = vsub.f32 %v1141, %v2407
      %v2409 = vand.u32 %v2408, 4294901760
      %2410 = vmatpush.msra.mxu0 %v2409
      %v2411 = vand.u32 %v1139, 4294901760
      %v2412 = vsub.f32 %v1139, %v2411
      %v2413 = vand.u32 %v2412, 4294901760
      %2414 = vmatpush.msra.mxu0 %v2413
      %v2415 = vand.u32 %v1137, 4294901760
      %v2416 = vsub.f32 %v1137, %v2415
      %v2417 = vand.u32 %v2416, 4294901760
      %2418 = vmatpush.msra.mxu0 %v2417
      %v2419 = vand.u32 %v1135, 4294901760
      %v2420 = vsub.f32 %v1135, %v2419
      %v2421 = vand.u32 %v2420, 4294901760
      %2422 = vmatpush.msra.mxu0 %v2421
      %v2423 = vand.u32 %v1133, 4294901760
      %v2424 = vsub.f32 %v1133, %v2423
      %v2425 = vand.u32 %v2424, 4294901760
      %2426 = vmatpush.msra.mxu0 %v2425
      %v2427 = vand.u32 %v1131, 4294901760
      %v2428 = vsub.f32 %v1131, %v2427
      %v2429 = vand.u32 %v2428, 4294901760
      %2430 = vmatpush.msra.mxu0 %v2429
      %v2431 = vand.u32 %v1129, 4294901760
      %v2432 = vsub.f32 %v1129, %v2431
      %v2433 = vand.u32 %v2432, 4294901760
      %2434 = vmatpush.msra.mxu0 %v2433
      %v2435 = vand.u32 %v1127, 4294901760
      %v2436 = vsub.f32 %v1127, %v2435
      %v2437 = vand.u32 %v2436, 4294901760
      %2438 = vmatpush.msra.mxu0 %v2437
      %v2439 = vand.u32 %v1125, 4294901760
      %v2440 = vsub.f32 %v1125, %v2439
      %v2441 = vand.u32 %v2440, 4294901760
      %2442 = vmatpush.msra.mxu0 %v2441
      %v2443 = vand.u32 %v1123, 4294901760
      %v2444 = vsub.f32 %v1123, %v2443
      %v2445 = vand.u32 %v2444, 4294901760
      %2446 = vmatpush.msra.mxu0 %v2445
      %v2447 = vand.u32 %v1121, 4294901760
      %v2448 = vsub.f32 %v1121, %v2447
      %v2449 = vand.u32 %v2448, 4294901760
      %2450 = vmatpush.msra.mxu0 %v2449
      %v2451 = vand.u32 %v1119, 4294901760
      %v2452 = vsub.f32 %v1119, %v2451
      %v2453 = vand.u32 %v2452, 4294901760
      %2454 = vmatpush.msra.mxu0 %v2453
      %v2455 = vand.u32 %v1117, 4294901760
      %v2456 = vsub.f32 %v1117, %v2455
      %v2457 = vand.u32 %v2456, 4294901760
      %2458 = vmatpush.msra.mxu0 %v2457
      %v2459 = vand.u32 %v1115, 4294901760
      %v2460 = vsub.f32 %v1115, %v2459
      %v2461 = vand.u32 %v2460, 4294901760
      %2462 = vmatpush.msra.mxu0 %v2461
      %v2463 = vand.u32 %v1113, 4294901760
      %v2464 = vsub.f32 %v1113, %v2463
      %v2465 = vand.u32 %v2464, 4294901760
      %2466 = vmatpush.msra.mxu0 %v2465
      %v2467 = vand.u32 %v1111, 4294901760
      %v2468 = vsub.f32 %v1111, %v2467
      %v2469 = vand.u32 %v2468, 4294901760
      %2470 = vmatpush.msra.mxu0 %v2469
      %v2471 = vand.u32 %v1146, 4294901760
      %2472 = vmatmul.f32.gmra.mxu0 %v2471
      %v2473 = vpop.f32.mrf.mxu0
      %v2474 = vadd.f32 %v2405, %v2473
      %2475 = vdwg.mxu0
      %v2476 = vand.u32 %v1141, 4294901760
      %2477 = vmatpush.msra.mxu0 %v2476
      %v2478 = vand.u32 %v1139, 4294901760
      %2479 = vmatpush.msra.mxu0 %v2478
      %v2480 = vand.u32 %v1137, 4294901760
      %2481 = vmatpush.msra.mxu0 %v2480
      %v2482 = vand.u32 %v1135, 4294901760
      %2483 = vmatpush.msra.mxu0 %v2482
      %v2484 = vand.u32 %v1133, 4294901760
      %2485 = vmatpush.msra.mxu0 %v2484
      %v2486 = vand.u32 %v1131, 4294901760
      %2487 = vmatpush.msra.mxu0 %v2486
      %v2488 = vand.u32 %v1129, 4294901760
      %2489 = vmatpush.msra.mxu0 %v2488
      %v2490 = vand.u32 %v1127, 4294901760
      %2491 = vmatpush.msra.mxu0 %v2490
      %v2492 = vand.u32 %v1125, 4294901760
      %2493 = vmatpush.msra.mxu0 %v2492
      %v2494 = vand.u32 %v1123, 4294901760
      %2495 = vmatpush.msra.mxu0 %v2494
      %v2496 = vand.u32 %v1121, 4294901760
      %2497 = vmatpush.msra.mxu0 %v2496
      %v2498 = vand.u32 %v1119, 4294901760
      %2499 = vmatpush.msra.mxu0 %v2498
      %v2500 = vand.u32 %v1117, 4294901760
      %2501 = vmatpush.msra.mxu0 %v2500
      %v2502 = vand.u32 %v1115, 4294901760
      %2503 = vmatpush.msra.mxu0 %v2502
      %v2504 = vand.u32 %v1113, 4294901760
      %2505 = vmatpush.msra.mxu0 %v2504
      %v2506 = vand.u32 %v1111, 4294901760
      %2507 = vmatpush.msra.mxu0 %v2506
      %v2508 = vand.u32 %v1146, 4294901760
      %2509 = vmatmul.f32.gmra.mxu0 %v2508
      %v2510 = vpop.f32.mrf.mxu0
      %v2511 = vadd.f32 %v2474, %v2510
      %2512 = vdwg.mxu0
      %v2513 = vadd.f32 %v286, %v295
      %v2514 = vadd.f32 %v2513, %v298
      %v2515 = vadd.f32 %v2514, %v301
      %vm2516 = vcmp.gt.f32.partialorder %v2515, 0.999
      %v2517 = vsel %vm2516, 1.0, 0.0
      %v2519 = vperm.slane %v2517, 1
      %v2520 = vperm.slane %v2517, 3
      %v2523 = vperm.slane %v2519, 1
      %v2524 = vperm.slane %v2520, 1
      %v2525 = vmul.f32 %v1829, %v2523
      %v2526 = vmul.f32 %v2511, %v2524
      %v2529 = vrot.slane %v2526, 4
      %vm2530 = vcmask 1043456
      %v2531 = vsel %vm2530, %v2525, %v2529
      %2533 = vst [vmem:[%s250] sm:$0xff] %v2531
      %s2534 = smul.u32 2, %s19
      %p2535 = scmp.lt.s32.totalorder %s18, 1
      %s2536 = scalar_select %p2535, %s18, 1
      %p2537 = scmp.lt.s32.totalorder %s2534, 1
      %s2538 = scalar_select %p2537, %s2534, 1
      %s2539 = smul.addr %s2536, 2
      %s2540 = sadd.s32 %s2538, %s2539
      %s2541 = smul.addr %s2540, 4
      %s2542 = scalar_lea.vmem %s3, %s2541
      // Predicated region
      $region33: #{backward_warp.1} parent=31 // pred_check
        %p2543 = pneg %p126
      $region34: #{backward_warp.1} parent=31 // pred_check_branch
        %2545 = sbr.rel (%p2543) target = $region36
      $region35: #{backward_warp.1} parent=31 // pred_region
        %s2546 = smul.u32 2, %s19
      $region36: #{backward_warp.1} parent=31 // pred_fallthru
        _
    $region32: #{backward_warp.1} parent=5 // pred_fallthru
      _
    %p2547 = scmp.le.s32.totalorder 2, %s9
    // Predicated region
    $region37: #{backward_warp.1} parent=5 // pred_check
      %p2548 = pneg %p2547
    $region38: #{backward_warp.1} parent=5 // pred_check_branch
      %2550 = sbr.rel (%p2548) target = $region40
    $region39: #{backward_warp.1} parent=5 // pred_region
      %s2551 = ssub.s32 %s9, 2
      // Predicated region
      $region41: #{backward_warp.1} parent=39 // pred_check
        %p2552 = pneg %p132
      $region42: #{backward_warp.1} parent=39 // pred_check_branch
        %2554 = sbr.rel (%p2552) target = $region44
      $region43: #{backward_warp.1} parent=39 // pred_region
        %s2555 = smul.u32 2, %s21
        %p2556 = scmp.lt.s32.totalorder %s20, 1
        %s2557 = scalar_select %p2556, %s20, 1
        %p2558 = scmp.lt.s32.totalorder %s2555, 1
        %s2559 = scalar_select %p2558, %s2555, 1
        %s2560 = smul.addr %s2557, 2
        %s2561 = sadd.s32 %s2559, %s2560
        %s2562 = smul.addr %s2561, 4
        %s2563 = scalar_lea.vmem %s3, %s2562
      $region44: #{backward_warp.1} parent=39 // pred_fallthru
        _
    $region40: #{backward_warp.1} parent=5 // pred_fallthru
      _
  $region6: #{backward_warp.1} parent=0 // loop_footer
    %s13 = sadd.s32 1, %s9
  $region7: #{backward_warp.1} parent=0 // loop_footer_branch
    %8 = sbr.rel target = $region3
  $region8: #{backward_warp.1} parent=0 // loop_exit
    _

</llo_original>
